<compile_context>
chip_gen: v6e
topology: v6e:2x2x1
jax: 0.10.0
libtpu: 0.0.40
codegen_flags: <defaults>
</compile_context>

<pallas_src>
import functools

import jax
import jax.numpy as jnp
from jax import lax
from jax.experimental import pallas as pl
from jax.experimental.pallas import tpu as pltpu


def _round_up(x, m):
    return (x + m - 1) // m * m


def _pick_row_tile(Ho, Wo, Wp, Cp, Coutp, ksize, stride,
                   in_itemsize, out_itemsize, budget):
    """Largest output-row tile whose (double-buffered) blocks fit the VMEM budget."""
    for rt in (128, 64, 32, 16, 8, 4, 2, 1):
        rt = min(rt, Ho)
        span = (rt - 1) * stride + ksize
        need = (2 * span * Wp * Cp * in_itemsize          # input row-window x2 bufs
                + 2 * rt * Wo * Coutp * out_itemsize      # output block x2 bufs
                + 2 * (ksize * ksize * Cp * 4 + Cp * 4    # weights / biases
                       + Cp * Coutp * 2 + Coutp * 4))
        if need <= budget:
            return rt
    return 1


def _dwconv_kernel(x_ref, dw_w_ref, dw_b_ref, pw_w_ref, pw_b_ref, o_ref,
                   *, k, stride, row_tile, Wo):
    # x_ref   : (span, Wp, Cp)        halo'd input row-window, channels lane-padded
    # dw_w_ref: (k*k, Cp)             depthwise weights, BN scale folded in (f32)
    # dw_b_ref: (1, Cp)               folded BN bias (depthwise)
    # pw_w_ref: (Cp, Coutp)           pointwise weights, BN scale folded in (bf16)
    # pw_b_ref: (1, Coutp)            folded BN bias (pointwise)
    # o_ref   : (row_tile, Wo, Coutp)
    Cp = x_ref.shape[-1]
    Coutp = pw_w_ref.shape[-1]
    hs = (row_tile - 1) * stride + 1
    ws = (Wo - 1) * stride + 1

    dw_w = dw_w_ref[...]                      # tiny, keep resident
    dw_b = dw_b_ref[...]

    # Depthwise conv: k*k shifted multiply-accumulates on the VPU; each tap is a
    # slice read straight from the VMEM ref (no full-tile materialization).
    acc = None
    for dy in range(k):
        for dx in range(k):
            patch = x_ref[dy:dy + hs, dx:dx + ws, :].astype(jnp.float32)
            if stride > 1:
                patch = patch[::stride, ::stride, :]
            tap = patch * dw_w[dy * k + dx]
            acc = tap if acc is None else acc + tap

    # Folded BN bias + SiLU (exp/recip go to the EUP slot).
    y = acc + dw_b
    y = y * jax.nn.sigmoid(y)

    # Pointwise 1x1 conv == (row_tile*Wo, Cp) x (Cp, Coutp) matmul on the MXU,
    # bf16 operands / f32 accumulation, then folded BN bias + SiLU.
    z = jnp.dot(y.reshape(row_tile * Wo, Cp).astype(jnp.bfloat16),
                pw_w_ref[...],
                preferred_element_type=jnp.float32)
    z = z + pw_b_ref[...]
    z = z * jax.nn.sigmoid(z)
    o_ref[...] = z.reshape(row_tile, Wo, Coutp).astype(o_ref.dtype)


def dwconv_forward(x_nchw, params, *, ksize, stride, row_tile=None,
                   vmem_budget_bytes=24 * 1024 * 1024):
    """Pallas implementation of DWConv.forward. Input/output are NCHW."""
    (dw_w, dw_gamma, dw_beta, dw_mean, dw_var,
     pw_w, pw_gamma, pw_beta, pw_mean, pw_var) = params
    eps = 1e-5
    LANE = 128

    N, C, H, W = x_nchw.shape
    Cout = pw_w.shape[0]
    pad = (ksize - 1) // 2
    Ho = (H + 2 * pad - ksize) // stride + 1
    Wo = (W + 2 * pad - ksize) // stride + 1
    Hp, Wp = H + 2 * pad, W + 2 * pad
    Cp = _round_up(C, LANE)
    Coutp = _round_up(Cout, LANE)

    # ---- fold BatchNorm scale into the conv weights (constant, wrapper-side) ----
    dw_scale = dw_gamma / jnp.sqrt(dw_var + eps)
    dw_bias = dw_beta - dw_mean * dw_scale
    pw_scale = pw_gamma / jnp.sqrt(pw_var + eps)
    pw_bias = pw_beta - pw_mean * pw_scale

    # Depthwise weight (C,1,k,k) -> (k*k, C), scale folded, zero-padded to Cp lanes.
    dw_w_kkc = jnp.transpose(dw_w[:, 0, :, :], (1, 2, 0)).reshape(ksize * ksize, C)
    dw_w_kkc = jnp.pad(dw_w_kkc * dw_scale[None, :], ((0, 0), (0, Cp - C)))
    dw_b_p = jnp.pad(dw_bias[None, :], ((0, 0), (0, Cp - C)))

    # Pointwise weight (Cout,C,1,1) -> (C, Cout), scale folded into columns,
    # zero-padded on both axes, cast to bf16 for the MXU.
    pw_w_cc = jnp.transpose(pw_w[:, :, 0, 0], (1, 0)) * pw_scale[None, :]
    pw_w_cc = jnp.pad(pw_w_cc, ((0, Cp - C), (0, Coutp - Cout))).astype(jnp.bfloat16)
    pw_b_p = jnp.pad(pw_bias[None, :], ((0, 0), (0, Coutp - Cout)))

    # ---- NCHW -> NHWC, spatial zero-pad, channel lane-pad (glue) ----
    x = jnp.transpose(x_nchw, (0, 2, 3, 1))
    x = jnp.pad(x, ((0, 0), (pad, pad), (pad, pad), (0, Cp - C)))

    # ---- spatial row tiling (VMEM-budgeted) ----
    if row_tile is None:
        row_tile = _pick_row_tile(Ho, Wo, Wp, Cp, Coutp, ksize, stride,
                                  x.dtype.itemsize, x_nchw.dtype.itemsize,
                                  vmem_budget_bytes)
    row_tile = max(1, min(row_tile, Ho))
    span = (row_tile - 1) * stride + ksize
    n_rb = -(-Ho // row_tile)                  # cdiv
    Ho_pad = n_rb * row_tile
    hp_need = (n_rb - 1) * row_tile * stride + span
    if hp_need > Hp:
        x = jnp.pad(x, ((0, 0), (0, hp_need - Hp), (0, 0), (0, 0)))

    # Overlapping (halo'd) row windows: (N, n_rb, span, Wp, Cp).
    if n_rb == 1:
        xwin = x[:, None, :span]               # no duplication needed
    else:
        row_idx = (jnp.arange(n_rb, dtype=jnp.int32)[:, None] * (row_tile * stride)
                   + jnp.arange(span, dtype=jnp.int32)[None, :])
        xwin = jnp.take(x, row_idx, axis=1)    # one gather of row slabs

    kernel = functools.partial(_dwconv_kernel, k=ksize, stride=stride,
                               row_tile=row_tile, Wo=Wo)

    out_nhwc = pl.pallas_call(
        kernel,
        out_shape=jax.ShapeDtypeStruct((N, Ho_pad, Wo, Coutp), x_nchw.dtype),
        grid_spec=pltpu.PrefetchScalarGridSpec(
            num_scalar_prefetch=0,
            grid=(N, n_rb),
            in_specs=[
                pl.BlockSpec((None, None, span, Wp, Cp),
                             lambda b, r: (b, r, 0, 0, 0)),
                pl.BlockSpec((ksize * ksize, Cp), lambda b, r: (0, 0)),
                pl.BlockSpec((1, Cp), lambda b, r: (0, 0)),
                pl.BlockSpec((Cp, Coutp), lambda b, r: (0, 0)),
                pl.BlockSpec((1, Coutp), lambda b, r: (0, 0)),
            ],
            out_specs=pl.BlockSpec((None, row_tile, Wo, Coutp),
                                   lambda b, r: (b, r, 0, 0)),
        ),
        compiler_params=pltpu.CompilerParams(
            dimension_semantics=("parallel", "parallel"),
            vmem_limit_bytes=32 * 1024 * 1024),
    )(xwin, dw_w_kkc, dw_b_p, pw_w_cc, pw_b_p)

    out = out_nhwc[:, :Ho, :, :Cout]           # drop row / channel padding
    return jnp.transpose(out, (0, 3, 1, 2))    # back to NCHW


def reference_forward(x_nchw, params, *, ksize, stride):
    """Pure-JAX reference (inference-mode BatchNorm), NCHW like PyTorch."""
    (dw_w, dw_gamma, dw_beta, dw_mean, dw_var,
     pw_w, pw_gamma, pw_beta, pw_mean, pw_var) = params
    eps = 1e-5
    pad = (ksize - 1) // 2
    C = x_nchw.shape[1]

    y = lax.conv_general_dilated(
        x_nchw, dw_w, window_strides=(stride, stride),
        padding=[(pad, pad), (pad, pad)],
        dimension_numbers=('NCHW', 'OIHW', 'NCHW'),
        feature_group_count=C)
    s = dw_gamma / jnp.sqrt(dw_var + eps)
    y = y * s[None, :, None, None] + (dw_beta - dw_mean * s)[None, :, None, None]
    y = y * jax.nn.sigmoid(y)

    z = lax.conv_general_dilated(
        y, pw_w, window_strides=(1, 1), padding=[(0, 0), (0, 0)],
        dimension_numbers=('NCHW', 'OIHW', 'NCHW'))
    s2 = pw_gamma / jnp.sqrt(pw_var + eps)
    z = z * s2[None, :, None, None] + (pw_beta - pw_mean * s2)[None, :, None, None]
    z = z * jax.nn.sigmoid(z)
    return z


if __name__ == "__main__":
    # Small, deterministic config: DWConv(in_channels=4, out_channels=8, ksize=3)
    N, C, H, W = 2, 4, 16, 16
    Cout, ksize, stride = 8, 3, 1

    key = jax.random.PRNGKey(0)
    keys = jax.random.split(key, 11)

    x = jax.random.normal(keys[0], (N, C, H, W), jnp.float32)

    # Depthwise conv weight (C, 1, k, k), no bias; BatchNorm(C) params.
    dw_w = jax.random.normal(keys[1], (C, 1, ksize, ksize), jnp.float32) * 0.3
    dw_gamma = 1.0 + 0.1 * jax.random.normal(keys[2], (C,), jnp.float32)
    dw_beta = 0.1 * jax.random.normal(keys[3], (C,), jnp.float32)
    dw_mean = 0.1 * jax.random.normal(keys[4], (C,), jnp.float32)
    dw_var = 0.5 + jnp.abs(jax.random.normal(keys[5], (C,), jnp.float32))

    # Pointwise conv weight (Cout, C, 1, 1), no bias; BatchNorm(Cout) params.
    pw_w = jax.random.normal(keys[6], (Cout, C, 1, 1), jnp.float32) * 0.3
    pw_gamma = 1.0 + 0.1 * jax.random.normal(keys[7], (Cout,), jnp.float32)
    pw_beta = 0.1 * jax.random.normal(keys[8], (Cout,), jnp.float32)
    pw_mean = 0.1 * jax.random.normal(keys[9], (Cout,), jnp.float32)
    pw_var = 0.5 + jnp.abs(jax.random.normal(keys[10], (Cout,), jnp.float32))

    params = (dw_w, dw_gamma, dw_beta, dw_mean, dw_var,
              pw_w, pw_gamma, pw_beta, pw_mean, pw_var)

    ref = jax.block_until_ready(reference_forward(x, params, ksize=ksize, stride=stride))

    # Run 1: auto-picked row tile (whole image fits one row block at toy shapes).
    out = jax.block_until_ready(dwconv_forward(x, params, ksize=ksize, stride=stride))
    assert out.shape == (N, Cout, H, W), out.shape
    err = float(jnp.max(jnp.abs(out - ref)))
    # bf16 MXU operands -> looser tolerance than pure-f32.
    assert jnp.allclose(out, ref, atol=5e-2, rtol=5e-2), err

    # Run 2: small explicit row tile exercises the halo'd multi-block grid path
    # (n_rb=3 with a ragged last block) that realistic feature maps hit.
    out2 = jax.block_until_ready(
        dwconv_forward(x, params, ksize=ksize, stride=stride, row_tile=6))
    err2 = float(jnp.max(jnp.abs(out2 - ref)))
    assert jnp.allclose(out2, ref, atol=5e-2, rtol=5e-2), err2

    print("KERNEL_OK")
</pallas_src>

<mosaic_0001>
module attributes {stable_mosaic.version = 11 : i64} {
  func.func @_dwconv_kernel(%arg0: i32, %arg1: i32, %arg2: memref<1x1x18x18x128xf32, #tpu.memory_space<vmem>>, %arg3: memref<9x128xf32, #tpu.memory_space<vmem>>, %arg4: memref<1x128xf32, #tpu.memory_space<vmem>>, %arg5: memref<128x128xbf16, #tpu.memory_space<vmem>>, %arg6: memref<1x128xf32, #tpu.memory_space<vmem>>, %arg7: memref<1x16x16x128xf32, #tpu.memory_space<vmem>>) attributes {dimension_semantics = [#tpu.dimension_semantics<parallel>, #tpu.dimension_semantics<parallel>], iteration_bounds = array<i64: 2, 1>, scalar_prefetch = 0 : i64, scratch_operands = 0 : i64, tpu.core_type = #tpu.core_type<tc>, window_params = [{transform_indices = @transform_0, window_bounds = array<i64: 1, 1, 18, 18, 128>}, {pipeline_mode = #tpu.pipeline_mode<synchronous>, transform_indices = @transform_1, window_bounds = array<i64: 9, 128>}, {pipeline_mode = #tpu.pipeline_mode<synchronous>, transform_indices = @transform_2, window_bounds = array<i64: 1, 128>}, {pipeline_mode = #tpu.pipeline_mode<synchronous>, transform_indices = @transform_3, window_bounds = array<i64: 128, 128>}, {pipeline_mode = #tpu.pipeline_mode<synchronous>, transform_indices = @transform_4, window_bounds = array<i64: 1, 128>}, {transform_indices = @transform_5, window_bounds = array<i64: 1, 16, 16, 128>}]} {
    %c0 = arith.constant 0 : index
    %c0_0 = arith.constant 0 : index
    %0 = vector.load %arg3[%c0, %c0_0] : memref<9x128xf32, #tpu.memory_space<vmem>>, vector<9x128xf32>
    %c0_1 = arith.constant 0 : index
    %c0_2 = arith.constant 0 : index
    %1 = vector.load %arg4[%c0_1, %c0_2] : memref<1x128xf32, #tpu.memory_space<vmem>>, vector<1x128xf32>
    %c0_3 = arith.constant 0 : index
    %c0_4 = arith.constant 0 : index
    %c0_5 = arith.constant 0 : index
    %c0_6 = arith.constant 0 : index
    %c0_7 = arith.constant 0 : index
    %2 = vector.load %arg2[%c0_3, %c0_4, %c0_5, %c0_6, %c0_7] : memref<1x1x18x18x128xf32, #tpu.memory_space<vmem>>, vector<1x1x16x16x128xf32>
    %3 = vector.shape_cast %2 : vector<1x1x16x16x128xf32> to vector<16x16x128xf32>
    %4 = vector.extract_strided_slice %0 {offsets = [0, 0], sizes = [1, 128], strides = [1, 1]} : vector<9x128xf32> to vector<1x128xf32>
    %5 = vector.shape_cast %4 : vector<1x128xf32> to vector<128xf32>
    %6 = vector.shape_cast %5 : vector<128xf32> to vector<1x1x128xf32>
    %7 = vector.broadcast %6 : vector<1x1x128xf32> to vector<16x16x128xf32>
    %8 = arith.mulf %3, %7 : vector<16x16x128xf32>
    %c0_8 = arith.constant 0 : index
    %c0_9 = arith.constant 0 : index
    %c0_10 = arith.constant 0 : index
    %c1 = arith.constant 1 : index
    %c0_11 = arith.constant 0 : index
    %9 = vector.load %arg2[%c0_8, %c0_9, %c0_10, %c1, %c0_11] : memref<1x1x18x18x128xf32, #tpu.memory_space<vmem>>, vector<1x1x16x16x128xf32>
    %10 = vector.shape_cast %9 : vector<1x1x16x16x128xf32> to vector<16x16x128xf32>
    %11 = vector.extract_strided_slice %0 {offsets = [1, 0], sizes = [1, 128], strides = [1, 1]} : vector<9x128xf32> to vector<1x128xf32>
    %12 = vector.shape_cast %11 : vector<1x128xf32> to vector<128xf32>
    %13 = vector.shape_cast %12 : vector<128xf32> to vector<1x1x128xf32>
    %14 = vector.broadcast %13 : vector<1x1x128xf32> to vector<16x16x128xf32>
    %15 = arith.mulf %10, %14 : vector<16x16x128xf32>
    %16 = arith.addf %8, %15 : vector<16x16x128xf32>
    %c0_12 = arith.constant 0 : index
    %c0_13 = arith.constant 0 : index
    %c0_14 = arith.constant 0 : index
    %c2 = arith.constant 2 : index
    %c0_15 = arith.constant 0 : index
    %17 = vector.load %arg2[%c0_12, %c0_13, %c0_14, %c2, %c0_15] : memref<1x1x18x18x128xf32, #tpu.memory_space<vmem>>, vector<1x1x16x16x128xf32>
    %18 = vector.shape_cast %17 : vector<1x1x16x16x128xf32> to vector<16x16x128xf32>
    %19 = vector.extract_strided_slice %0 {offsets = [2, 0], sizes = [1, 128], strides = [1, 1]} : vector<9x128xf32> to vector<1x128xf32>
    %20 = vector.shape_cast %19 : vector<1x128xf32> to vector<128xf32>
    %21 = vector.shape_cast %20 : vector<128xf32> to vector<1x1x128xf32>
    %22 = vector.broadcast %21 : vector<1x1x128xf32> to vector<16x16x128xf32>
    %23 = arith.mulf %18, %22 : vector<16x16x128xf32>
    %24 = arith.addf %16, %23 : vector<16x16x128xf32>
    %c0_16 = arith.constant 0 : index
    %c0_17 = arith.constant 0 : index
    %c1_18 = arith.constant 1 : index
    %c0_19 = arith.constant 0 : index
    %c0_20 = arith.constant 0 : index
    %25 = vector.load %arg2[%c0_16, %c0_17, %c1_18, %c0_19, %c0_20] : memref<1x1x18x18x128xf32, #tpu.memory_space<vmem>>, vector<1x1x16x16x128xf32>
    %26 = vector.shape_cast %25 : vector<1x1x16x16x128xf32> to vector<16x16x128xf32>
    %27 = vector.extract_strided_slice %0 {offsets = [3, 0], sizes = [1, 128], strides = [1, 1]} : vector<9x128xf32> to vector<1x128xf32>
    %28 = vector.shape_cast %27 : vector<1x128xf32> to vector<128xf32>
    %29 = vector.shape_cast %28 : vector<128xf32> to vector<1x1x128xf32>
    %30 = vector.broadcast %29 : vector<1x1x128xf32> to vector<16x16x128xf32>
    %31 = arith.mulf %26, %30 : vector<16x16x128xf32>
    %32 = arith.addf %24, %31 : vector<16x16x128xf32>
    %c0_21 = arith.constant 0 : index
    %c0_22 = arith.constant 0 : index
    %c1_23 = arith.constant 1 : index
    %c1_24 = arith.constant 1 : index
    %c0_25 = arith.constant 0 : index
    %33 = vector.load %arg2[%c0_21, %c0_22, %c1_23, %c1_24, %c0_25] : memref<1x1x18x18x128xf32, #tpu.memory_space<vmem>>, vector<1x1x16x16x128xf32>
    %34 = vector.shape_cast %33 : vector<1x1x16x16x128xf32> to vector<16x16x128xf32>
    %35 = vector.extract_strided_slice %0 {offsets = [4, 0], sizes = [1, 128], strides = [1, 1]} : vector<9x128xf32> to vector<1x128xf32>
    %36 = vector.shape_cast %35 : vector<1x128xf32> to vector<128xf32>
    %37 = vector.shape_cast %36 : vector<128xf32> to vector<1x1x128xf32>
    %38 = vector.broadcast %37 : vector<1x1x128xf32> to vector<16x16x128xf32>
    %39 = arith.mulf %34, %38 : vector<16x16x128xf32>
    %40 = arith.addf %32, %39 : vector<16x16x128xf32>
    %c0_26 = arith.constant 0 : index
    %c0_27 = arith.constant 0 : index
    %c1_28 = arith.constant 1 : index
    %c2_29 = arith.constant 2 : index
    %c0_30 = arith.constant 0 : index
    %41 = vector.load %arg2[%c0_26, %c0_27, %c1_28, %c2_29, %c0_30] : memref<1x1x18x18x128xf32, #tpu.memory_space<vmem>>, vector<1x1x16x16x128xf32>
    %42 = vector.shape_cast %41 : vector<1x1x16x16x128xf32> to vector<16x16x128xf32>
    %43 = vector.extract_strided_slice %0 {offsets = [5, 0], sizes = [1, 128], strides = [1, 1]} : vector<9x128xf32> to vector<1x128xf32>
    %44 = vector.shape_cast %43 : vector<1x128xf32> to vector<128xf32>
    %45 = vector.shape_cast %44 : vector<128xf32> to vector<1x1x128xf32>
    %46 = vector.broadcast %45 : vector<1x1x128xf32> to vector<16x16x128xf32>
    %47 = arith.mulf %42, %46 : vector<16x16x128xf32>
    %48 = arith.addf %40, %47 : vector<16x16x128xf32>
    %c0_31 = arith.constant 0 : index
    %c0_32 = arith.constant 0 : index
    %c2_33 = arith.constant 2 : index
    %c0_34 = arith.constant 0 : index
    %c0_35 = arith.constant 0 : index
    %49 = vector.load %arg2[%c0_31, %c0_32, %c2_33, %c0_34, %c0_35] : memref<1x1x18x18x128xf32, #tpu.memory_space<vmem>>, vector<1x1x16x16x128xf32>
    %50 = vector.shape_cast %49 : vector<1x1x16x16x128xf32> to vector<16x16x128xf32>
    %51 = vector.extract_strided_slice %0 {offsets = [6, 0], sizes = [1, 128], strides = [1, 1]} : vector<9x128xf32> to vector<1x128xf32>
    %52 = vector.shape_cast %51 : vector<1x128xf32> to vector<128xf32>
    %53 = vector.shape_cast %52 : vector<128xf32> to vector<1x1x128xf32>
    %54 = vector.broadcast %53 : vector<1x1x128xf32> to vector<16x16x128xf32>
    %55 = arith.mulf %50, %54 : vector<16x16x128xf32>
    %56 = arith.addf %48, %55 : vector<16x16x128xf32>
    %c0_36 = arith.constant 0 : index
    %c0_37 = arith.constant 0 : index
    %c2_38 = arith.constant 2 : index
    %c1_39 = arith.constant 1 : index
    %c0_40 = arith.constant 0 : index
    %57 = vector.load %arg2[%c0_36, %c0_37, %c2_38, %c1_39, %c0_40] : memref<1x1x18x18x128xf32, #tpu.memory_space<vmem>>, vector<1x1x16x16x128xf32>
    %58 = vector.shape_cast %57 : vector<1x1x16x16x128xf32> to vector<16x16x128xf32>
    %59 = vector.extract_strided_slice %0 {offsets = [7, 0], sizes = [1, 128], strides = [1, 1]} : vector<9x128xf32> to vector<1x128xf32>
    %60 = vector.shape_cast %59 : vector<1x128xf32> to vector<128xf32>
    %61 = vector.shape_cast %60 : vector<128xf32> to vector<1x1x128xf32>
    %62 = vector.broadcast %61 : vector<1x1x128xf32> to vector<16x16x128xf32>
    %63 = arith.mulf %58, %62 : vector<16x16x128xf32>
    %64 = arith.addf %56, %63 : vector<16x16x128xf32>
    %c0_41 = arith.constant 0 : index
    %c0_42 = arith.constant 0 : index
    %c2_43 = arith.constant 2 : index
    %c2_44 = arith.constant 2 : index
    %c0_45 = arith.constant 0 : index
    %65 = vector.load %arg2[%c0_41, %c0_42, %c2_43, %c2_44, %c0_45] : memref<1x1x18x18x128xf32, #tpu.memory_space<vmem>>, vector<1x1x16x16x128xf32>
    %66 = vector.shape_cast %65 : vector<1x1x16x16x128xf32> to vector<16x16x128xf32>
    %67 = vector.extract_strided_slice %0 {offsets = [8, 0], sizes = [1, 128], strides = [1, 1]} : vector<9x128xf32> to vector<1x128xf32>
    %68 = vector.shape_cast %67 : vector<1x128xf32> to vector<128xf32>
    %69 = vector.shape_cast %68 : vector<128xf32> to vector<1x1x128xf32>
    %70 = vector.broadcast %69 : vector<1x1x128xf32> to vector<16x16x128xf32>
    %71 = arith.mulf %66, %70 : vector<16x16x128xf32>
    %72 = arith.addf %64, %71 : vector<16x16x128xf32>
    %73 = vector.shape_cast %1 : vector<1x128xf32> to vector<1x1x128xf32>
    %74 = vector.broadcast %73 : vector<1x1x128xf32> to vector<16x16x128xf32>
    %75 = arith.addf %72, %74 : vector<16x16x128xf32>
    %76 = arith.negf %75 : vector<16x16x128xf32>
    %77 = math.exp %76 : vector<16x16x128xf32>
    %cst = arith.constant 1.000000e+00 : f32
    %78 = vector.broadcast %cst : f32 to vector<16x16x128xf32>
    %79 = arith.addf %78, %77 : vector<16x16x128xf32>
    %80 = arith.divf %78, %79 : vector<16x16x128xf32>
    %81 = arith.mulf %75, %80 : vector<16x16x128xf32>
    %82 = vector.shape_cast %81 : vector<16x16x128xf32> to vector<256x128xf32>
    %83 = arith.truncf %82 : vector<256x128xf32> to vector<256x128xbf16>
    %c0_46 = arith.constant 0 : index
    %c0_47 = arith.constant 0 : index
    %84 = vector.load %arg5[%c0_46, %c0_47] : memref<128x128xbf16, #tpu.memory_space<vmem>>, vector<128x128xbf16>
    %cst_48 = arith.constant dense<0.000000e+00> : vector<256x128xf32>
    %85 = tpu.matmul %83, %84, %cst_48 {dimension_numbers = #tpu.dot_dimension_numbers<[1], [0], [0], [1], [0, 0, 1, 1], [], []>} : vector<256x128xbf16>, vector<128x128xbf16>, vector<256x128xf32> -> vector<256x128xf32>
    %c0_49 = arith.constant 0 : index
    %c0_50 = arith.constant 0 : index
    %86 = vector.load %arg6[%c0_49, %c0_50] : memref<1x128xf32, #tpu.memory_space<vmem>>, vector<1x128xf32>
    %87 = vector.broadcast %86 : vector<1x128xf32> to vector<256x128xf32>
    %88 = arith.addf %85, %87 : vector<256x128xf32>
    %89 = arith.negf %88 : vector<256x128xf32>
    %90 = math.exp %89 : vector<256x128xf32>
    %cst_51 = arith.constant 1.000000e+00 : f32
    %91 = vector.broadcast %cst_51 : f32 to vector<256x128xf32>
    %92 = arith.addf %91, %90 : vector<256x128xf32>
    %93 = arith.divf %91, %92 : vector<256x128xf32>
    %94 = arith.mulf %88, %93 : vector<256x128xf32>
    %95 = vector.shape_cast %94 : vector<256x128xf32> to vector<16x16x128xf32>
    %c0_52 = arith.constant 0 : index
    %c0_53 = arith.constant 0 : index
    %c0_54 = arith.constant 0 : index
    %c0_55 = arith.constant 0 : index
    %96 = vector.load %arg7[%c0_52, %c0_53, %c0_54, %c0_55] : memref<1x16x16x128xf32, #tpu.memory_space<vmem>>, vector<1x16x16x128xf32>
    %97 = vector.shape_cast %96 : vector<1x16x16x128xf32> to vector<16x16x128xf32>
    %98 = vector.shape_cast %95 : vector<16x16x128xf32> to vector<1x16x16x128xf32>
    tpu.vector_store %arg7[%c0_52, %c0_53, %c0_54, %c0_55], %98 {strides = array<i32>} : memref<1x16x16x128xf32, #tpu.memory_space<vmem>>, vector<1x16x16x128xf32>,
    return
  }
  func.func @transform_0(%arg0: i32, %arg1: i32) -> (i32, i32, i32, i32, i32) {
    %c0_i32 = arith.constant 0 : i32
    %c0_i32_0 = arith.constant 0 : i32
    %c0_i32_1 = arith.constant 0 : i32
    %c0_i32_2 = arith.constant 0 : i32
    return %arg0, %arg1, %c0_i32, %c0_i32_0, %c0_i32_1 : i32, i32, i32, i32, i32
  }
  func.func @transform_1(%arg0: i32, %arg1: i32) -> (i32, i32) {
    %c0_i32 = arith.constant 0 : i32
    %c0_i32_0 = arith.constant 0 : i32
    %c0_i32_1 = arith.constant 0 : i32
    return %c0_i32, %c0_i32_0 : i32, i32
  }
  func.func @transform_2(%arg0: i32, %arg1: i32) -> (i32, i32) {
    %c0_i32 = arith.constant 0 : i32
    %c0_i32_0 = arith.constant 0 : i32
    %c0_i32_1 = arith.constant 0 : i32
    return %c0_i32, %c0_i32_0 : i32, i32
  }
  func.func @transform_3(%arg0: i32, %arg1: i32) -> (i32, i32) {
    %c0_i32 = arith.constant 0 : i32
    %c0_i32_0 = arith.constant 0 : i32
    %c0_i32_1 = arith.constant 0 : i32
    return %c0_i32, %c0_i32_0 : i32, i32
  }
  func.func @transform_4(%arg0: i32, %arg1: i32) -> (i32, i32) {
    %c0_i32 = arith.constant 0 : i32
    %c0_i32_0 = arith.constant 0 : i32
    %c0_i32_1 = arith.constant 0 : i32
    return %c0_i32, %c0_i32_0 : i32, i32
  }
  func.func @transform_5(%arg0: i32, %arg1: i32) -> (i32, i32, i32, i32) {
    %c0_i32 = arith.constant 0 : i32
    %c0_i32_0 = arith.constant 0 : i32
    %c0_i32_1 = arith.constant 0 : i32
    return %arg0, %arg1, %c0_i32, %c0_i32_0 : i32, i32, i32, i32
  }
}

</mosaic_0001>

<llo_original>
// kernel: tpu_custom_call.1
$region0: #{tpu_custom_call.1}
  #allocation0 [shape = 'u32[]', space=smem, size = 0x4, offset = 0x4, fixed_abs, tag = 'smem constant byte address 0x4 - core index']
  #allocation1 [shape = 'u32[144,128]{1,0:T(1,128)}', space=vmem, size = 0x12000, scoped, tag = 'internal scratch']
  %s0 = inlined_call_operand.vmem [shape: f32[2,1,18,18,128], index: 0, kind: input, shape index: {}]
  %s1 = inlined_call_operand.vmem [shape: f32[9,128], index: 1, kind: input, shape index: {}]
  %s2 = inlined_call_operand.vmem [shape: f32[1,128], index: 2, kind: input, shape index: {}]
  %s3 = inlined_call_operand.vmem [shape: bf16[128,128], index: 3, kind: input, shape index: {}]
  %s4 = inlined_call_operand.vmem [shape: f32[1,128], index: 4, kind: input, shape index: {}]
  %s5 = inlined_call_operand.hbm [shape: f32[2,16,16,128], index: 5, kind: output, shape index: {}]
  %s6 = sld [smem:[#allocation0]]
  $region53: #{tpu_custom_call.1} parent=0
    _
  %s8 = ssub.s32 1, %s6
  %s9 = scalar_select 0, %s8, %s6
  $region1: #{tpu_custom_call.1} parent=0
    #allocation2 [shape = 'u8[262144]{0}', space=vmem, size = 0x40000, scoped, tag = 'output window, operand 0']
    #allocation3 [shape = 's32[2]{0}', space=sflag, size = 0x8, scoped, tag = 'scoped memory for tpu_custom_call.1']
    %10 = vsyncpa [#allocation3], 0
    %s11 = scalar_lea.sflag [#allocation3], 1
    %12 = vsyncpa %s11, 0
    loop: start=0, step=1, limit=4
    $region2: #{tpu_custom_call.1} parent=1 // loop_pre_header
      _
    $region3: #{tpu_custom_call.1} parent=1 // loop_header
      %s14 = sphi 0, %s18
      %p15 = scmp.ge.s32.totalorder %s14, 4
      %s21 = sphi 0, %s33
      %s22 = sphi 0, %s29
      %s23 = sphi 0, %s21
      %s24 = sphi 0, %s22
      %s25 = sphi 0, %s23
      %s26 = sphi 0, %s24
      %s38 = sphi 0, %s40
      %s41 = sphi 0, %s38
      %s42 = sphi 0, %s41
      %s58 = sphi 0, %s42
      %s62 = sphi 0, %s62
      %s64 = sphi 0, %s62
      %s65 = sphi 0, %s64
      %s79 = sphi 0, %s65
      %s83 = sphi 0, %s83
      %s85 = sphi 0, %s83
      %s86 = sphi 0, %s85
      %s100 = sphi 0, %s86
      %s104 = sphi 0, %s104
      %s106 = sphi 0, %s104
      %s107 = sphi 0, %s106
      %s121 = sphi 0, %s107
      %s125 = sphi 0, %s125
      %s127 = sphi 0, %s125
      %s128 = sphi 0, %s127
      %s142 = sphi 0, %s128
      %s150 = sphi 0, %s152
      %s153 = sphi 0, %s150
      %s154 = sphi 0, %s153
      %s170 = sphi 0, %s154
    $region4: #{tpu_custom_call.1} parent=1 // loop_header_branch
      %17 = sbr.rel (%p15) target = $region8
    $region5: #{tpu_custom_call.1} parent=1 // loop_body
      %s19 = ssub.s32 %s14, 1
      %s20 = ssub.s32 %s14, 2
      %s27 = sadd.s32 1, %s22
      %p28 = scmp.ge.s32.totalorder %s27, 1
      %s29 = scalar_select %p28, 0, %s27
      %s30 = sadd.s32 1, %s21
      %s31 = scalar_select %p28, %s30, %s21
      %p32 = scmp.ge.s32.totalorder %s31, 2
      %s33 = scalar_select %p32, 0, %s31
      %s34 = ssub.s32 %s21, %s33
      %s35 = ssub.s32 %s22, %s29
      %s36 = sor.u32 %s34, %s35
      %p37 = scmp.eq.s32.totalorder %s36, 0
      %s39 = sadd.s32 %s38, 1
      %s40 = scalar_select %p37, %s38, %s39
      %p43 = pneg %p37
      %p44 = scmp.eq.s32.totalorder %s14, 1
      %p45 = por %p43, %p44
      %p46 = scmp.ne.s32.totalorder %s38, %s41
      %p47 = scmp.eq.s32.totalorder %s14, 0
      %p48 = por %p46, %p47
      %p49 = scmp.ne.s32.totalorder %s38, %s41
      %p50 = scmp.eq.s32.totalorder %s19, 1
      %p51 = por %p49, %p50
      %p52 = scmp.ne.s32.totalorder %s41, %s42
      %p53 = scmp.eq.s32.totalorder %s19, 0
      %p54 = por %p52, %p53
      %p55 = scmp.ne.s32.totalorder %s41, %s42
      %p56 = scmp.eq.s32.totalorder %s20, 1
      %p57 = por %p55, %p56
      %p59 = scmp.ne.s32.totalorder %s42, %s58
      %p60 = scmp.eq.s32.totalorder %s20, 0
      %p61 = por %p59, %p60
      %s63 = sadd.s32 %s62, 1
      %p66 = scmp.eq.s32.totalorder %s14, 1
      %p67 = scmp.ne.s32.totalorder %s62, %s64
      %p68 = scmp.eq.s32.totalorder %s14, 0
      %p69 = por %p67, %p68
      %p70 = scmp.ne.s32.totalorder %s62, %s64
      %p71 = scmp.eq.s32.totalorder %s19, 1
      %p72 = por %p70, %p71
      %p73 = scmp.ne.s32.totalorder %s64, %s65
      %p74 = scmp.eq.s32.totalorder %s19, 0
      %p75 = por %p73, %p74
      %p76 = scmp.ne.s32.totalorder %s64, %s65
      %p77 = scmp.eq.s32.totalorder %s20, 1
      %p78 = por %p76, %p77
      %p80 = scmp.ne.s32.totalorder %s65, %s79
      %p81 = scmp.eq.s32.totalorder %s20, 0
      %p82 = por %p80, %p81
      %s84 = sadd.s32 %s83, 1
      %p87 = scmp.eq.s32.totalorder %s14, 1
      %p88 = scmp.ne.s32.totalorder %s83, %s85
      %p89 = scmp.eq.s32.totalorder %s14, 0
      %p90 = por %p88, %p89
      %p91 = scmp.ne.s32.totalorder %s83, %s85
      %p92 = scmp.eq.s32.totalorder %s19, 1
      %p93 = por %p91, %p92
      %p94 = scmp.ne.s32.totalorder %s85, %s86
      %p95 = scmp.eq.s32.totalorder %s19, 0
      %p96 = por %p94, %p95
      %p97 = scmp.ne.s32.totalorder %s85, %s86
      %p98 = scmp.eq.s32.totalorder %s20, 1
      %p99 = por %p97, %p98
      %p101 = scmp.ne.s32.totalorder %s86, %s100
      %p102 = scmp.eq.s32.totalorder %s20, 0
      %p103 = por %p101, %p102
      %s105 = sadd.s32 %s104, 1
      %p108 = scmp.eq.s32.totalorder %s14, 1
      %p109 = scmp.ne.s32.totalorder %s104, %s106
      %p110 = scmp.eq.s32.totalorder %s14, 0
      %p111 = por %p109, %p110
      %p112 = scmp.ne.s32.totalorder %s104, %s106
      %p113 = scmp.eq.s32.totalorder %s19, 1
      %p114 = por %p112, %p113
      %p115 = scmp.ne.s32.totalorder %s106, %s107
      %p116 = scmp.eq.s32.totalorder %s19, 0
      %p117 = por %p115, %p116
      %p118 = scmp.ne.s32.totalorder %s106, %s107
      %p119 = scmp.eq.s32.totalorder %s20, 1
      %p120 = por %p118, %p119
      %p122 = scmp.ne.s32.totalorder %s107, %s121
      %p123 = scmp.eq.s32.totalorder %s20, 0
      %p124 = por %p122, %p123
      %s126 = sadd.s32 %s125, 1
      %p129 = scmp.eq.s32.totalorder %s14, 1
      %p130 = scmp.ne.s32.totalorder %s125, %s127
      %p131 = scmp.eq.s32.totalorder %s14, 0
      %p132 = por %p130, %p131
      %p133 = scmp.ne.s32.totalorder %s125, %s127
      %p134 = scmp.eq.s32.totalorder %s19, 1
      %p135 = por %p133, %p134
      %p136 = scmp.ne.s32.totalorder %s127, %s128
      %p137 = scmp.eq.s32.totalorder %s19, 0
      %p138 = por %p136, %p137
      %p139 = scmp.ne.s32.totalorder %s127, %s128
      %p140 = scmp.eq.s32.totalorder %s20, 1
      %p141 = por %p139, %p140
      %p143 = scmp.ne.s32.totalorder %s128, %s142
      %p144 = scmp.eq.s32.totalorder %s20, 0
      %p145 = por %p143, %p144
      %s146 = ssub.s32 %s21, %s33
      %s147 = ssub.s32 %s22, %s29
      %s148 = sor.u32 %s146, %s147
      %p149 = scmp.eq.s32.totalorder %s148, 0
      %s151 = sadd.s32 %s150, 1
      %s152 = scalar_select %p149, %s150, %s151
      %p155 = pneg %p149
      %p156 = scmp.eq.s32.totalorder %s14, 1
      %p157 = por %p155, %p156
      %p158 = scmp.ne.s32.totalorder %s150, %s153
      %p159 = scmp.eq.s32.totalorder %s14, 0
      %p160 = por %p158, %p159
      %p161 = scmp.ne.s32.totalorder %s150, %s153
      %p162 = scmp.eq.s32.totalorder %s19, 1
      %p163 = por %p161, %p162
      %p164 = scmp.ne.s32.totalorder %s153, %s154
      %p165 = scmp.eq.s32.totalorder %s19, 0
      %p166 = por %p164, %p165
      %p167 = scmp.ne.s32.totalorder %s153, %s154
      %p168 = scmp.eq.s32.totalorder %s20, 1
      %p169 = por %p167, %p168
      %p171 = scmp.ne.s32.totalorder %s154, %s170
      %p172 = scmp.eq.s32.totalorder %s20, 0
      %p173 = por %p171, %p172
      %p174 = scmp.le.s32.totalorder 1, %s14
      %p175 = scmp.lt.s32.totalorder %s14, 3
      %p176 = pnand %p174, %p175
      %p177 = pneg %p176
      // Predicated region
      $region9: #{tpu_custom_call.1} parent=5 // pred_check
        _
      $region10: #{tpu_custom_call.1} parent=5 // pred_check_branch
        %179 = sbr.rel (%p176) target = $region12
      $region11: #{tpu_custom_call.1} parent=5 // pred_region
        %s180 = ssub.s32 %s14, 1
        // Predicated region
        $region13: #{tpu_custom_call.1} parent=11 // pred_check
          %p181 = pneg %p75
        $region14: #{tpu_custom_call.1} parent=11 // pred_check_branch
          %183 = sbr.rel (%p181) target = $region16
        $region15: #{tpu_custom_call.1} parent=11 // pred_region
          _
        $region16: #{tpu_custom_call.1} parent=11 // pred_fallthru
          _
        // Predicated region
        $region17: #{tpu_custom_call.1} parent=11 // pred_check
          %p184 = pneg %p96
        $region18: #{tpu_custom_call.1} parent=11 // pred_check_branch
          %186 = sbr.rel (%p184) target = $region20
        $region19: #{tpu_custom_call.1} parent=11 // pred_region
          _
        $region20: #{tpu_custom_call.1} parent=11 // pred_fallthru
          _
        // Predicated region
        $region21: #{tpu_custom_call.1} parent=11 // pred_check
          %p187 = pneg %p117
        $region22: #{tpu_custom_call.1} parent=11 // pred_check_branch
          %189 = sbr.rel (%p187) target = $region24
        $region23: #{tpu_custom_call.1} parent=11 // pred_region
          _
        $region24: #{tpu_custom_call.1} parent=11 // pred_fallthru
          _
        // Predicated region
        $region25: #{tpu_custom_call.1} parent=11 // pred_check
          %p190 = pneg %p138
        $region26: #{tpu_custom_call.1} parent=11 // pred_check_branch
          %192 = sbr.rel (%p190) target = $region28
        $region27: #{tpu_custom_call.1} parent=11 // pred_region
          _
        $region28: #{tpu_custom_call.1} parent=11 // pred_fallthru
          _
      $region12: #{tpu_custom_call.1} parent=5 // pred_fallthru
        _
      %p193 = scmp.lt.s32.totalorder %s14, 2
      // Predicated region
      $region29: #{tpu_custom_call.1} parent=5 // pred_check
        %p194 = pneg %p193
      $region30: #{tpu_custom_call.1} parent=5 // pred_check_branch
        %196 = sbr.rel (%p194) target = $region32
      $region31: #{tpu_custom_call.1} parent=5 // pred_region
        // Predicated region
        $region33: #{tpu_custom_call.1} parent=31 // pred_check
          %p197 = pneg %p48
        $region34: #{tpu_custom_call.1} parent=31 // pred_check_branch
          %199 = sbr.rel (%p197) target = $region36
        $region35: #{tpu_custom_call.1} parent=31 // pred_region
          %p200 = scmp.lt.s32.totalorder %s21, 1
          %s201 = scalar_select %p200, %s21, 1
          %p202 = scmp.lt.s32.totalorder %s22, 0
          %s203 = scalar_select %p202, %s22, 0
          %s204 = smul.addr %s203, 54
          %s205 = smul.addr %s201, 54
          %s206 = sadd.s32 %s204, %s205
          %s207 = smul.addr %s206, 8
          %s208 = scalar_lea.vmem %s0, %s207
        $region36: #{tpu_custom_call.1} parent=31 // pred_fallthru
          _
      $region32: #{tpu_custom_call.1} parent=5 // pred_fallthru
        _
      %p209 = scmp.le.s32.totalorder 1, %s14
      %p210 = scmp.lt.s32.totalorder %s14, 3
      %p211 = pnand %p209, %p210
      %p212 = pneg %p211
      // Predicated region
      $region37: #{tpu_custom_call.1} parent=5 // pred_check
        _
      $region38: #{tpu_custom_call.1} parent=5 // pred_check_branch
        %214 = sbr.rel (%p211) target = $region40
      $region39: #{tpu_custom_call.1} parent=5 // pred_region
        %s215 = ssub.s32 %s14, 1
        %p216 = scmp.lt.s32.totalorder %s23, 1
        %s217 = scalar_select %p216, %s23, 1
        %p218 = scmp.lt.s32.totalorder %s24, 0
        %s219 = scalar_select %p218, %s24, 0
        %s220 = smul.addr %s219, 54
        %s221 = smul.addr %s217, 54
        %s222 = sadd.s32 %s220, %s221
        %s223 = smul.addr %s222, 8
        %s224 = scalar_lea.vmem %s0, %s223
        %p225 = pneg %p54
        %p226 = pneg %p51
        %p227 = pneg %p75
        %p228 = pneg %p72
        %p229 = pneg %p96
        %p230 = pneg %p93
        %p231 = pneg %p117
        %p232 = pneg %p114
        %p233 = pneg %p138
        %p234 = pneg %p135
        %p235 = pneg %p166
        %p236 = pneg %p163
        %s237 = sand.u32 %s153, 1
        %s238 = scalar_lea.sflag [#allocation3], %s237
        %s239 = sand.u32 %s153, 1
        %s240 = smul.addr %s239, 256
        %s241 = scalar_lea.vmem [#allocation2], %s240
        %p242 = scmp.lt.s32.totalorder %s23, 1
        %s243 = scalar_select %p242, %s23, 1
        %p244 = scmp.lt.s32.totalorder %s24, 0
        %s245 = scalar_select %p244, %s24, 0
        %s246 = smul.addr %s245, 54
        %s247 = smul.addr %s243, 54
        %s248 = sadd.s32 %s246, %s247
        %s249 = smul.addr %s248, 8
        %s250 = scalar_lea.vmem %s0, %s249
        %s251 = smul.u32 16, %s24
        %v253 = vld [vmem:[%s1] sm:$0xff]
        %v254 = vld [vmem:[%s1 + $0x8] sm:$0x1]
        %v255 = vld [vmem:[%s2] sm:$0x1]
        %v256 = vld [vmem:[%s250] sm:$0xff]
        %v257 = vld [vmem:[%s250 + $0x8] sm:$0xff]
        %v258 = vld [vmem:[%s250 + $0x18] sm:$0xff]
        %v259 = vld [vmem:[%s250 + $0x20] sm:$0xff]
        %v260 = vld [vmem:[%s250 + $0x30] sm:$0xff]
        %v261 = vld [vmem:[%s250 + $0x38] sm:$0xff]
        %v262 = vld [vmem:[%s250 + $0x48] sm:$0xff]
        %v263 = vld [vmem:[%s250 + $0x50] sm:$0xff]
        %v264 = vld [vmem:[%s250 + $0x60] sm:$0xff]
        %v265 = vld [vmem:[%s250 + $0x68] sm:$0xff]
        %v266 = vld [vmem:[%s250 + $0x78] sm:$0xff]
        %v267 = vld [vmem:[%s250 + $0x80] sm:$0xff]
        %v268 = vld [vmem:[%s250 + $0x90] sm:$0xff]
        %v269 = vld [vmem:[%s250 + $0x98] sm:$0xff]
        %v270 = vld [vmem:[%s250 + $0xa8] sm:$0xff]
        %v271 = vld [vmem:[%s250 + $0xb0] sm:$0xff]
        %v272 = vld [vmem:[%s250 + $0xc0] sm:$0xff]
        %v273 = vld [vmem:[%s250 + $0xc8] sm:$0xff]
        %v274 = vld [vmem:[%s250 + $0xd8] sm:$0xff]
        %v275 = vld [vmem:[%s250 + $0xe0] sm:$0xff]
        %v276 = vld [vmem:[%s250 + $0xf0] sm:$0xff]
        %v277 = vld [vmem:[%s250 + $0xf8] sm:$0xff]
        %v278 = vld [vmem:[%s250 + $0x108] sm:$0xff]
        %v279 = vld [vmem:[%s250 + $0x110] sm:$0xff]
        %v280 = vld [vmem:[%s250 + $0x120] sm:$0xff]
        %v281 = vld [vmem:[%s250 + $0x128] sm:$0xff]
        %v282 = vld [vmem:[%s250 + $0x138] sm:$0xff]
        %v283 = vld [vmem:[%s250 + $0x140] sm:$0xff]
        %v284 = vld [vmem:[%s250 + $0x150] sm:$0xff]
        %v285 = vld [vmem:[%s250 + $0x158] sm:$0xff]
        %v286 = vld [vmem:[%s250 + $0x168] sm:$0xff]
        %v287 = vld [vmem:[%s250 + $0x170] sm:$0xff]
        %v288 = vlaneseq
        %v289 = vshrl.u32 %v288, 7
        %v290 = vsub.s32 0, %v289
        %v291 = vrot.slane %v253, %v290
        %v292 = vmul.f32 %v256, %v291
        %v293 = vmul.f32 %v257, %v291
        %v294 = vmul.f32 %v258, %v291
        %v295 = vmul.f32 %v259, %v291
        %v296 = vmul.f32 %v260, %v291
        %v297 = vmul.f32 %v261, %v291
        %v298 = vmul.f32 %v262, %v291
        %v299 = vmul.f32 %v263, %v291
        %v300 = vmul.f32 %v264, %v291
        %v301 = vmul.f32 %v265, %v291
        %v302 = vmul.f32 %v266, %v291
        %v303 = vmul.f32 %v267, %v291
        %v304 = vmul.f32 %v268, %v291
        %v305 = vmul.f32 %v269, %v291
        %v306 = vmul.f32 %v270, %v291
        %v307 = vmul.f32 %v271, %v291
        %v308 = vmul.f32 %v272, %v291
        %v309 = vmul.f32 %v273, %v291
        %v310 = vmul.f32 %v274, %v291
        %v311 = vmul.f32 %v275, %v291
        %v312 = vmul.f32 %v276, %v291
        %v313 = vmul.f32 %v277, %v291
        %v314 = vmul.f32 %v278, %v291
        %v315 = vmul.f32 %v279, %v291
        %v316 = vmul.f32 %v280, %v291
        %v317 = vmul.f32 %v281, %v291
        %v318 = vmul.f32 %v282, %v291
        %v319 = vmul.f32 %v283, %v291
        %v320 = vmul.f32 %v284, %v291
        %v321 = vmul.f32 %v285, %v291
        %v322 = vmul.f32 %v286, %v291
        %v323 = vmul.f32 %v287, %v291
        %v324 = vld [vmem:[%s250 + $0x1] sm:$0xff]
        %v325 = vld [vmem:[%s250 + $0x9] sm:$0xff]
        %v326 = vld [vmem:[%s250 + $0x19] sm:$0xff]
        %v327 = vld [vmem:[%s250 + $0x21] sm:$0xff]
        %v328 = vld [vmem:[%s250 + $0x31] sm:$0xff]
        %v329 = vld [vmem:[%s250 + $0x39] sm:$0xff]
        %v330 = vld [vmem:[%s250 + $0x49] sm:$0xff]
        %v331 = vld [vmem:[%s250 + $0x51] sm:$0xff]
        %v332 = vld [vmem:[%s250 + $0x61] sm:$0xff]
        %v333 = vld [vmem:[%s250 + $0x69] sm:$0xff]
        %v334 = vld [vmem:[%s250 + $0x79] sm:$0xff]
        %v335 = vld [vmem:[%s250 + $0x81] sm:$0xff]
        %v336 = vld [vmem:[%s250 + $0x91] sm:$0xff]
        %v337 = vld [vmem:[%s250 + $0x99] sm:$0xff]
        %v338 = vld [vmem:[%s250 + $0xa9] sm:$0xff]
        %v339 = vld [vmem:[%s250 + $0xb1] sm:$0xff]
        %v340 = vld [vmem:[%s250 + $0xc1] sm:$0xff]
        %v341 = vld [vmem:[%s250 + $0xc9] sm:$0xff]
        %v342 = vld [vmem:[%s250 + $0xd9] sm:$0xff]
        %v343 = vld [vmem:[%s250 + $0xe1] sm:$0xff]
        %v344 = vld [vmem:[%s250 + $0xf1] sm:$0xff]
        %v345 = vld [vmem:[%s250 + $0xf9] sm:$0xff]
        %v346 = vld [vmem:[%s250 + $0x109] sm:$0xff]
        %v347 = vld [vmem:[%s250 + $0x111] sm:$0xff]
        %v348 = vld [vmem:[%s250 + $0x121] sm:$0xff]
        %v349 = vld [vmem:[%s250 + $0x129] sm:$0xff]
        %v350 = vld [vmem:[%s250 + $0x139] sm:$0xff]
        %v351 = vld [vmem:[%s250 + $0x141] sm:$0xff]
        %v352 = vld [vmem:[%s250 + $0x151] sm:$0xff]
        %v353 = vld [vmem:[%s250 + $0x159] sm:$0xff]
        %v354 = vld [vmem:[%s250 + $0x169] sm:$0xff]
        %v355 = vld [vmem:[%s250 + $0x171] sm:$0xff]
        %v356 = vlaneseq
        %v357 = vshrl.u32 %v356, 7
        %v358 = vsub.s32 1, %v357
        %v359 = vrot.slane %v253, %v358
        %v360 = vmul.f32 %v324, %v359
        %v361 = vmul.f32 %v325, %v359
        %v362 = vmul.f32 %v326, %v359
        %v363 = vmul.f32 %v327, %v359
        %v364 = vmul.f32 %v328, %v359
        %v365 = vmul.f32 %v329, %v359
        %v366 = vmul.f32 %v330, %v359
        %v367 = vmul.f32 %v331, %v359
        %v368 = vmul.f32 %v332, %v359
        %v369 = vmul.f32 %v333, %v359
        %v370 = vmul.f32 %v334, %v359
        %v371 = vmul.f32 %v335, %v359
        %v372 = vmul.f32 %v336, %v359
        %v373 = vmul.f32 %v337, %v359
        %v374 = vmul.f32 %v338, %v359
        %v375 = vmul.f32 %v339, %v359
        %v376 = vmul.f32 %v340, %v359
        %v377 = vmul.f32 %v341, %v359
        %v378 = vmul.f32 %v342, %v359
        %v379 = vmul.f32 %v343, %v359
        %v380 = vmul.f32 %v344, %v359
        %v381 = vmul.f32 %v345, %v359
        %v382 = vmul.f32 %v346, %v359
        %v383 = vmul.f32 %v347, %v359
        %v384 = vmul.f32 %v348, %v359
        %v385 = vmul.f32 %v349, %v359
        %v386 = vmul.f32 %v350, %v359
        %v387 = vmul.f32 %v351, %v359
        %v388 = vmul.f32 %v352, %v359
        %v389 = vmul.f32 %v353, %v359
        %v390 = vmul.f32 %v354, %v359
        %v391 = vmul.f32 %v355, %v359
        %v392 = vadd.f32 %v292, %v360
        %v393 = vadd.f32 %v293, %v361
        %v394 = vadd.f32 %v294, %v362
        %v395 = vadd.f32 %v295, %v363
        %v396 = vadd.f32 %v296, %v364
        %v397 = vadd.f32 %v297, %v365
        %v398 = vadd.f32 %v298, %v366
        %v399 = vadd.f32 %v299, %v367
        %v400 = vadd.f32 %v300, %v368
        %v401 = vadd.f32 %v301, %v369
        %v402 = vadd.f32 %v302, %v370
        %v403 = vadd.f32 %v303, %v371
        %v404 = vadd.f32 %v304, %v372
        %v405 = vadd.f32 %v305, %v373
        %v406 = vadd.f32 %v306, %v374
        %v407 = vadd.f32 %v307, %v375
        %v408 = vadd.f32 %v308, %v376
        %v409 = vadd.f32 %v309, %v377
        %v410 = vadd.f32 %v310, %v378
        %v411 = vadd.f32 %v311, %v379
        %v412 = vadd.f32 %v312, %v380
        %v413 = vadd.f32 %v313, %v381
        %v414 = vadd.f32 %v314, %v382
        %v415 = vadd.f32 %v315, %v383
        %v416 = vadd.f32 %v316, %v384
        %v417 = vadd.f32 %v317, %v385
        %v418 = vadd.f32 %v318, %v386
        %v419 = vadd.f32 %v319, %v387
        %v420 = vadd.f32 %v320, %v388
        %v421 = vadd.f32 %v321, %v389
        %v422 = vadd.f32 %v322, %v390
        %v423 = vadd.f32 %v323, %v391
        %v424 = vld [vmem:[%s250 + $0x2] sm:$0xff]
        %v425 = vld [vmem:[%s250 + $0xa] sm:$0xff]
        %v426 = vld [vmem:[%s250 + $0x1a] sm:$0xff]
        %v427 = vld [vmem:[%s250 + $0x22] sm:$0xff]
        %v428 = vld [vmem:[%s250 + $0x32] sm:$0xff]
        %v429 = vld [vmem:[%s250 + $0x3a] sm:$0xff]
        %v430 = vld [vmem:[%s250 + $0x4a] sm:$0xff]
        %v431 = vld [vmem:[%s250 + $0x52] sm:$0xff]
        %v432 = vld [vmem:[%s250 + $0x62] sm:$0xff]
        %v433 = vld [vmem:[%s250 + $0x6a] sm:$0xff]
        %v434 = vld [vmem:[%s250 + $0x7a] sm:$0xff]
        %v435 = vld [vmem:[%s250 + $0x82] sm:$0xff]
        %v436 = vld [vmem:[%s250 + $0x92] sm:$0xff]
        %v437 = vld [vmem:[%s250 + $0x9a] sm:$0xff]
        %v438 = vld [vmem:[%s250 + $0xaa] sm:$0xff]
        %v439 = vld [vmem:[%s250 + $0xb2] sm:$0xff]
        %v440 = vld [vmem:[%s250 + $0xc2] sm:$0xff]
        %v441 = vld [vmem:[%s250 + $0xca] sm:$0xff]
        %v442 = vld [vmem:[%s250 + $0xda] sm:$0xff]
        %v443 = vld [vmem:[%s250 + $0xe2] sm:$0xff]
        %v444 = vld [vmem:[%s250 + $0xf2] sm:$0xff]
        %v445 = vld [vmem:[%s250 + $0xfa] sm:$0xff]
        %v446 = vld [vmem:[%s250 + $0x10a] sm:$0xff]
        %v447 = vld [vmem:[%s250 + $0x112] sm:$0xff]
        %v448 = vld [vmem:[%s250 + $0x122] sm:$0xff]
        %v449 = vld [vmem:[%s250 + $0x12a] sm:$0xff]
        %v450 = vld [vmem:[%s250 + $0x13a] sm:$0xff]
        %v451 = vld [vmem:[%s250 + $0x142] sm:$0xff]
        %v452 = vld [vmem:[%s250 + $0x152] sm:$0xff]
        %v453 = vld [vmem:[%s250 + $0x15a] sm:$0xff]
        %v454 = vld [vmem:[%s250 + $0x16a] sm:$0xff]
        %v455 = vld [vmem:[%s250 + $0x172] sm:$0xff]
        %v456 = vlaneseq
        %v457 = vshrl.u32 %v456, 7
        %v458 = vsub.s32 2, %v457
        %v459 = vrot.slane %v253, %v458
        %v460 = vmul.f32 %v424, %v459
        %v461 = vmul.f32 %v425, %v459
        %v462 = vmul.f32 %v426, %v459
        %v463 = vmul.f32 %v427, %v459
        %v464 = vmul.f32 %v428, %v459
        %v465 = vmul.f32 %v429, %v459
        %v466 = vmul.f32 %v430, %v459
        %v467 = vmul.f32 %v431, %v459
        %v468 = vmul.f32 %v432, %v459
        %v469 = vmul.f32 %v433, %v459
        %v470 = vmul.f32 %v434, %v459
        %v471 = vmul.f32 %v435, %v459
        %v472 = vmul.f32 %v436, %v459
        %v473 = vmul.f32 %v437, %v459
        %v474 = vmul.f32 %v438, %v459
        %v475 = vmul.f32 %v439, %v459
        %v476 = vmul.f32 %v440, %v459
        %v477 = vmul.f32 %v441, %v459
        %v478 = vmul.f32 %v442, %v459
        %v479 = vmul.f32 %v443, %v459
        %v480 = vmul.f32 %v444, %v459
        %v481 = vmul.f32 %v445, %v459
        %v482 = vmul.f32 %v446, %v459
        %v483 = vmul.f32 %v447, %v459
        %v484 = vmul.f32 %v448, %v459
        %v485 = vmul.f32 %v449, %v459
        %v486 = vmul.f32 %v450, %v459
        %v487 = vmul.f32 %v451, %v459
        %v488 = vmul.f32 %v452, %v459
        %v489 = vmul.f32 %v453, %v459
        %v490 = vmul.f32 %v454, %v459
        %v491 = vmul.f32 %v455, %v459
        %v492 = vadd.f32 %v392, %v460
        %v493 = vadd.f32 %v393, %v461
        %v494 = vadd.f32 %v394, %v462
        %v495 = vadd.f32 %v395, %v463
        %v496 = vadd.f32 %v396, %v464
        %v497 = vadd.f32 %v397, %v465
        %v498 = vadd.f32 %v398, %v466
        %v499 = vadd.f32 %v399, %v467
        %v500 = vadd.f32 %v400, %v468
        %v501 = vadd.f32 %v401, %v469
        %v502 = vadd.f32 %v402, %v470
        %v503 = vadd.f32 %v403, %v471
        %v504 = vadd.f32 %v404, %v472
        %v505 = vadd.f32 %v405, %v473
        %v506 = vadd.f32 %v406, %v474
        %v507 = vadd.f32 %v407, %v475
        %v508 = vadd.f32 %v408, %v476
        %v509 = vadd.f32 %v409, %v477
        %v510 = vadd.f32 %v410, %v478
        %v511 = vadd.f32 %v411, %v479
        %v512 = vadd.f32 %v412, %v480
        %v513 = vadd.f32 %v413, %v481
        %v514 = vadd.f32 %v414, %v482
        %v515 = vadd.f32 %v415, %v483
        %v516 = vadd.f32 %v416, %v484
        %v517 = vadd.f32 %v417, %v485
        %v518 = vadd.f32 %v418, %v486
        %v519 = vadd.f32 %v419, %v487
        %v520 = vadd.f32 %v420, %v488
        %v521 = vadd.f32 %v421, %v489
        %v522 = vadd.f32 %v422, %v490
        %v523 = vadd.f32 %v423, %v491
        %s524 = scalar_lea.vmem %s250, 24
        %v525 = vld [vmem:[%s524] sm:$0xff]
        %v526 = vld [vmem:[%s524 + $0x8] sm:$0xff]
        %v527 = vld [vmem:[%s524 + $0x18] sm:$0xff]
        %v528 = vld [vmem:[%s524 + $0x20] sm:$0xff]
        %v529 = vld [vmem:[%s524 + $0x30] sm:$0xff]
        %v530 = vld [vmem:[%s524 + $0x38] sm:$0xff]
        %v531 = vld [vmem:[%s524 + $0x48] sm:$0xff]
        %v532 = vld [vmem:[%s524 + $0x50] sm:$0xff]
        %v533 = vld [vmem:[%s524 + $0x60] sm:$0xff]
        %v534 = vld [vmem:[%s524 + $0x68] sm:$0xff]
        %v535 = vld [vmem:[%s524 + $0x78] sm:$0xff]
        %v536 = vld [vmem:[%s524 + $0x80] sm:$0xff]
        %v537 = vld [vmem:[%s524 + $0x90] sm:$0xff]
        %v538 = vld [vmem:[%s524 + $0x98] sm:$0xff]
        %v539 = vld [vmem:[%s524 + $0xa8] sm:$0xff]
        %v540 = vld [vmem:[%s524 + $0xb0] sm:$0xff]
        %v541 = vld [vmem:[%s524 + $0xc0] sm:$0xff]
        %v542 = vld [vmem:[%s524 + $0xc8] sm:$0xff]
        %v543 = vld [vmem:[%s524 + $0xd8] sm:$0xff]
        %v544 = vld [vmem:[%s524 + $0xe0] sm:$0xff]
        %v545 = vld [vmem:[%s524 + $0xf0] sm:$0xff]
        %v546 = vld [vmem:[%s524 + $0xf8] sm:$0xff]
        %v547 = vld [vmem:[%s524 + $0x108] sm:$0xff]
        %v548 = vld [vmem:[%s524 + $0x110] sm:$0xff]
        %v549 = vld [vmem:[%s524 + $0x120] sm:$0xff]
        %v550 = vld [vmem:[%s524 + $0x128] sm:$0xff]
        %v551 = vld [vmem:[%s524 + $0x138] sm:$0xff]
        %v552 = vld [vmem:[%s524 + $0x140] sm:$0xff]
        %v553 = vld [vmem:[%s524 + $0x150] sm:$0xff]
        %v554 = vld [vmem:[%s524 + $0x158] sm:$0xff]
        %v555 = vld [vmem:[%s524 + $0x168] sm:$0xff]
        %v556 = vld [vmem:[%s524 + $0x170] sm:$0xff]
        %v557 = vlaneseq
        %v558 = vshrl.u32 %v557, 7
        %v559 = vsub.s32 3, %v558
        %v560 = vrot.slane %v253, %v559
        %v561 = vmul.f32 %v525, %v560
        %v562 = vmul.f32 %v526, %v560
        %v563 = vmul.f32 %v527, %v560
        %v564 = vmul.f32 %v528, %v560
        %v565 = vmul.f32 %v529, %v560
        %v566 = vmul.f32 %v530, %v560
        %v567 = vmul.f32 %v531, %v560
        %v568 = vmul.f32 %v532, %v560
        %v569 = vmul.f32 %v533, %v560
        %v570 = vmul.f32 %v534, %v560
        %v571 = vmul.f32 %v535, %v560
        %v572 = vmul.f32 %v536, %v560
        %v573 = vmul.f32 %v537, %v560
        %v574 = vmul.f32 %v538, %v560
        %v575 = vmul.f32 %v539, %v560
        %v576 = vmul.f32 %v540, %v560
        %v577 = vmul.f32 %v541, %v560
        %v578 = vmul.f32 %v542, %v560
        %v579 = vmul.f32 %v543, %v560
        %v580 = vmul.f32 %v544, %v560
        %v581 = vmul.f32 %v545, %v560
        %v582 = vmul.f32 %v546, %v560
        %v583 = vmul.f32 %v547, %v560
        %v584 = vmul.f32 %v548, %v560
        %v585 = vmul.f32 %v549, %v560
        %v586 = vmul.f32 %v550, %v560
        %v587 = vmul.f32 %v551, %v560
        %v588 = vmul.f32 %v552, %v560
        %v589 = vmul.f32 %v553, %v560
        %v590 = vmul.f32 %v554, %v560
        %v591 = vmul.f32 %v555, %v560
        %v592 = vmul.f32 %v556, %v560
        %v593 = vadd.f32 %v492, %v561
        %v594 = vadd.f32 %v493, %v562
        %v595 = vadd.f32 %v494, %v563
        %v596 = vadd.f32 %v495, %v564
        %v597 = vadd.f32 %v496, %v565
        %v598 = vadd.f32 %v497, %v566
        %v599 = vadd.f32 %v498, %v567
        %v600 = vadd.f32 %v499, %v568
        %v601 = vadd.f32 %v500, %v569
        %v602 = vadd.f32 %v501, %v570
        %v603 = vadd.f32 %v502, %v571
        %v604 = vadd.f32 %v503, %v572
        %v605 = vadd.f32 %v504, %v573
        %v606 = vadd.f32 %v505, %v574
        %v607 = vadd.f32 %v506, %v575
        %v608 = vadd.f32 %v507, %v576
        %v609 = vadd.f32 %v508, %v577
        %v610 = vadd.f32 %v509, %v578
        %v611 = vadd.f32 %v510, %v579
        %v612 = vadd.f32 %v511, %v580
        %v613 = vadd.f32 %v512, %v581
        %v614 = vadd.f32 %v513, %v582
        %v615 = vadd.f32 %v514, %v583
        %v616 = vadd.f32 %v515, %v584
        %v617 = vadd.f32 %v516, %v585
        %v618 = vadd.f32 %v517, %v586
        %v619 = vadd.f32 %v518, %v587
        %v620 = vadd.f32 %v519, %v588
        %v621 = vadd.f32 %v520, %v589
        %v622 = vadd.f32 %v521, %v590
        %v623 = vadd.f32 %v522, %v591
        %v624 = vadd.f32 %v523, %v592
        %v625 = vld [vmem:[%s524 + $0x1] sm:$0xff]
        %v626 = vld [vmem:[%s524 + $0x9] sm:$0xff]
        %v627 = vld [vmem:[%s524 + $0x19] sm:$0xff]
        %v628 = vld [vmem:[%s524 + $0x21] sm:$0xff]
        %v629 = vld [vmem:[%s524 + $0x31] sm:$0xff]
        %v630 = vld [vmem:[%s524 + $0x39] sm:$0xff]
        %v631 = vld [vmem:[%s524 + $0x49] sm:$0xff]
        %v632 = vld [vmem:[%s524 + $0x51] sm:$0xff]
        %v633 = vld [vmem:[%s524 + $0x61] sm:$0xff]
        %v634 = vld [vmem:[%s524 + $0x69] sm:$0xff]
        %v635 = vld [vmem:[%s524 + $0x79] sm:$0xff]
        %v636 = vld [vmem:[%s524 + $0x81] sm:$0xff]
        %v637 = vld [vmem:[%s524 + $0x91] sm:$0xff]
        %v638 = vld [vmem:[%s524 + $0x99] sm:$0xff]
        %v639 = vld [vmem:[%s524 + $0xa9] sm:$0xff]
        %v640 = vld [vmem:[%s524 + $0xb1] sm:$0xff]
        %v641 = vld [vmem:[%s524 + $0xc1] sm:$0xff]
        %v642 = vld [vmem:[%s524 + $0xc9] sm:$0xff]
        %v643 = vld [vmem:[%s524 + $0xd9] sm:$0xff]
        %v644 = vld [vmem:[%s524 + $0xe1] sm:$0xff]
        %v645 = vld [vmem:[%s524 + $0xf1] sm:$0xff]
        %v646 = vld [vmem:[%s524 + $0xf9] sm:$0xff]
        %v647 = vld [vmem:[%s524 + $0x109] sm:$0xff]
        %v648 = vld [vmem:[%s524 + $0x111] sm:$0xff]
        %v649 = vld [vmem:[%s524 + $0x121] sm:$0xff]
        %v650 = vld [vmem:[%s524 + $0x129] sm:$0xff]
        %v651 = vld [vmem:[%s524 + $0x139] sm:$0xff]
        %v652 = vld [vmem:[%s524 + $0x141] sm:$0xff]
        %v653 = vld [vmem:[%s524 + $0x151] sm:$0xff]
        %v654 = vld [vmem:[%s524 + $0x159] sm:$0xff]
        %v655 = vld [vmem:[%s524 + $0x169] sm:$0xff]
        %v656 = vld [vmem:[%s524 + $0x171] sm:$0xff]
        %v657 = vlaneseq
        %v658 = vshrl.u32 %v657, 7
        %v659 = vsub.s32 4, %v658
        %v660 = vrot.slane %v253, %v659
        %v661 = vmul.f32 %v625, %v660
        %v662 = vmul.f32 %v626, %v660
        %v663 = vmul.f32 %v627, %v660
        %v664 = vmul.f32 %v628, %v660
        %v665 = vmul.f32 %v629, %v660
        %v666 = vmul.f32 %v630, %v660
        %v667 = vmul.f32 %v631, %v660
        %v668 = vmul.f32 %v632, %v660
        %v669 = vmul.f32 %v633, %v660
        %v670 = vmul.f32 %v634, %v660
        %v671 = vmul.f32 %v635, %v660
        %v672 = vmul.f32 %v636, %v660
        %v673 = vmul.f32 %v637, %v660
        %v674 = vmul.f32 %v638, %v660
        %v675 = vmul.f32 %v639, %v660
        %v676 = vmul.f32 %v640, %v660
        %v677 = vmul.f32 %v641, %v660
        %v678 = vmul.f32 %v642, %v660
        %v679 = vmul.f32 %v643, %v660
        %v680 = vmul.f32 %v644, %v660
        %v681 = vmul.f32 %v645, %v660
        %v682 = vmul.f32 %v646, %v660
        %v683 = vmul.f32 %v647, %v660
        %v684 = vmul.f32 %v648, %v660
        %v685 = vmul.f32 %v649, %v660
        %v686 = vmul.f32 %v650, %v660
        %v687 = vmul.f32 %v651, %v660
        %v688 = vmul.f32 %v652, %v660
        %v689 = vmul.f32 %v653, %v660
        %v690 = vmul.f32 %v654, %v660
        %v691 = vmul.f32 %v655, %v660
        %v692 = vmul.f32 %v656, %v660
        %v693 = vadd.f32 %v593, %v661
        %v694 = vadd.f32 %v594, %v662
        %v695 = vadd.f32 %v595, %v663
        %v696 = vadd.f32 %v596, %v664
        %v697 = vadd.f32 %v597, %v665
        %v698 = vadd.f32 %v598, %v666
        %v699 = vadd.f32 %v599, %v667
        %v700 = vadd.f32 %v600, %v668
        %v701 = vadd.f32 %v601, %v669
        %v702 = vadd.f32 %v602, %v670
        %v703 = vadd.f32 %v603, %v671
        %v704 = vadd.f32 %v604, %v672
        %v705 = vadd.f32 %v605, %v673
        %v706 = vadd.f32 %v606, %v674
        %v707 = vadd.f32 %v607, %v675
        %v708 = vadd.f32 %v608, %v676
        %v709 = vadd.f32 %v609, %v677
        %v710 = vadd.f32 %v610, %v678
        %v711 = vadd.f32 %v611, %v679
        %v712 = vadd.f32 %v612, %v680
        %v713 = vadd.f32 %v613, %v681
        %v714 = vadd.f32 %v614, %v682
        %v715 = vadd.f32 %v615, %v683
        %v716 = vadd.f32 %v616, %v684
        %v717 = vadd.f32 %v617, %v685
        %v718 = vadd.f32 %v618, %v686
        %v719 = vadd.f32 %v619, %v687
        %v720 = vadd.f32 %v620, %v688
        %v721 = vadd.f32 %v621, %v689
        %v722 = vadd.f32 %v622, %v690
        %v723 = vadd.f32 %v623, %v691
        %v724 = vadd.f32 %v624, %v692
        %v725 = vld [vmem:[%s524 + $0x2] sm:$0xff]
        %v726 = vld [vmem:[%s524 + $0xa] sm:$0xff]
        %v727 = vld [vmem:[%s524 + $0x1a] sm:$0xff]
        %v728 = vld [vmem:[%s524 + $0x22] sm:$0xff]
        %v729 = vld [vmem:[%s524 + $0x32] sm:$0xff]
        %v730 = vld [vmem:[%s524 + $0x3a] sm:$0xff]
        %v731 = vld [vmem:[%s524 + $0x4a] sm:$0xff]
        %v732 = vld [vmem:[%s524 + $0x52] sm:$0xff]
        %v733 = vld [vmem:[%s524 + $0x62] sm:$0xff]
        %v734 = vld [vmem:[%s524 + $0x6a] sm:$0xff]
        %v735 = vld [vmem:[%s524 + $0x7a] sm:$0xff]
        %v736 = vld [vmem:[%s524 + $0x82] sm:$0xff]
        %v737 = vld [vmem:[%s524 + $0x92] sm:$0xff]
        %v738 = vld [vmem:[%s524 + $0x9a] sm:$0xff]
        %v739 = vld [vmem:[%s524 + $0xaa] sm:$0xff]
        %v740 = vld [vmem:[%s524 + $0xb2] sm:$0xff]
        %v741 = vld [vmem:[%s524 + $0xc2] sm:$0xff]
        %v742 = vld [vmem:[%s524 + $0xca] sm:$0xff]
        %v743 = vld [vmem:[%s524 + $0xda] sm:$0xff]
        %v744 = vld [vmem:[%s524 + $0xe2] sm:$0xff]
        %v745 = vld [vmem:[%s524 + $0xf2] sm:$0xff]
        %v746 = vld [vmem:[%s524 + $0xfa] sm:$0xff]
        %v747 = vld [vmem:[%s524 + $0x10a] sm:$0xff]
        %v748 = vld [vmem:[%s524 + $0x112] sm:$0xff]
        %v749 = vld [vmem:[%s524 + $0x122] sm:$0xff]
        %v750 = vld [vmem:[%s524 + $0x12a] sm:$0xff]
        %v751 = vld [vmem:[%s524 + $0x13a] sm:$0xff]
        %v752 = vld [vmem:[%s524 + $0x142] sm:$0xff]
        %v753 = vld [vmem:[%s524 + $0x152] sm:$0xff]
        %v754 = vld [vmem:[%s524 + $0x15a] sm:$0xff]
        %v755 = vld [vmem:[%s524 + $0x16a] sm:$0xff]
        %v756 = vld [vmem:[%s524 + $0x172] sm:$0xff]
        %v757 = vlaneseq
        %v758 = vshrl.u32 %v757, 7
        %v759 = vsub.s32 5, %v758
        %v760 = vrot.slane %v253, %v759
        %v761 = vmul.f32 %v725, %v760
        %v762 = vmul.f32 %v726, %v760
        %v763 = vmul.f32 %v727, %v760
        %v764 = vmul.f32 %v728, %v760
        %v765 = vmul.f32 %v729, %v760
        %v766 = vmul.f32 %v730, %v760
        %v767 = vmul.f32 %v731, %v760
        %v768 = vmul.f32 %v732, %v760
        %v769 = vmul.f32 %v733, %v760
        %v770 = vmul.f32 %v734, %v760
        %v771 = vmul.f32 %v735, %v760
        %v772 = vmul.f32 %v736, %v760
        %v773 = vmul.f32 %v737, %v760
        %v774 = vmul.f32 %v738, %v760
        %v775 = vmul.f32 %v739, %v760
        %v776 = vmul.f32 %v740, %v760
        %v777 = vmul.f32 %v741, %v760
        %v778 = vmul.f32 %v742, %v760
        %v779 = vmul.f32 %v743, %v760
        %v780 = vmul.f32 %v744, %v760
        %v781 = vmul.f32 %v745, %v760
        %v782 = vmul.f32 %v746, %v760
        %v783 = vmul.f32 %v747, %v760
        %v784 = vmul.f32 %v748, %v760
        %v785 = vmul.f32 %v749, %v760
        %v786 = vmul.f32 %v750, %v760
        %v787 = vmul.f32 %v751, %v760
        %v788 = vmul.f32 %v752, %v760
        %v789 = vmul.f32 %v753, %v760
        %v790 = vmul.f32 %v754, %v760
        %v791 = vmul.f32 %v755, %v760
        %v792 = vmul.f32 %v756, %v760
        %v793 = vadd.f32 %v693, %v761
        %v794 = vadd.f32 %v694, %v762
        %v795 = vadd.f32 %v695, %v763
        %v796 = vadd.f32 %v696, %v764
        %v797 = vadd.f32 %v697, %v765
        %v798 = vadd.f32 %v698, %v766
        %v799 = vadd.f32 %v699, %v767
        %v800 = vadd.f32 %v700, %v768
        %v801 = vadd.f32 %v701, %v769
        %v802 = vadd.f32 %v702, %v770
        %v803 = vadd.f32 %v703, %v771
        %v804 = vadd.f32 %v704, %v772
        %v805 = vadd.f32 %v705, %v773
        %v806 = vadd.f32 %v706, %v774
        %v807 = vadd.f32 %v707, %v775
        %v808 = vadd.f32 %v708, %v776
        %v809 = vadd.f32 %v709, %v777
        %v810 = vadd.f32 %v710, %v778
        %v811 = vadd.f32 %v711, %v779
        %v812 = vadd.f32 %v712, %v780
        %v813 = vadd.f32 %v713, %v781
        %v814 = vadd.f32 %v714, %v782
        %v815 = vadd.f32 %v715, %v783
        %v816 = vadd.f32 %v716, %v784
        %v817 = vadd.f32 %v717, %v785
        %v818 = vadd.f32 %v718, %v786
        %v819 = vadd.f32 %v719, %v787
        %v820 = vadd.f32 %v720, %v788
        %v821 = vadd.f32 %v721, %v789
        %v822 = vadd.f32 %v722, %v790
        %v823 = vadd.f32 %v723, %v791
        %v824 = vadd.f32 %v724, %v792
        %s825 = scalar_lea.vmem %s250, 48
        %v826 = vld [vmem:[%s825] sm:$0xff]
        %v827 = vld [vmem:[%s825 + $0x8] sm:$0xff]
        %v828 = vld [vmem:[%s825 + $0x18] sm:$0xff]
        %v829 = vld [vmem:[%s825 + $0x20] sm:$0xff]
        %v830 = vld [vmem:[%s825 + $0x30] sm:$0xff]
        %v831 = vld [vmem:[%s825 + $0x38] sm:$0xff]
        %v832 = vld [vmem:[%s825 + $0x48] sm:$0xff]
        %v833 = vld [vmem:[%s825 + $0x50] sm:$0xff]
        %v834 = vld [vmem:[%s825 + $0x60] sm:$0xff]
        %v835 = vld [vmem:[%s825 + $0x68] sm:$0xff]
        %v836 = vld [vmem:[%s825 + $0x78] sm:$0xff]
        %v837 = vld [vmem:[%s825 + $0x80] sm:$0xff]
        %v838 = vld [vmem:[%s825 + $0x90] sm:$0xff]
        %v839 = vld [vmem:[%s825 + $0x98] sm:$0xff]
        %v840 = vld [vmem:[%s825 + $0xa8] sm:$0xff]
        %v841 = vld [vmem:[%s825 + $0xb0] sm:$0xff]
        %v842 = vld [vmem:[%s825 + $0xc0] sm:$0xff]
        %v843 = vld [vmem:[%s825 + $0xc8] sm:$0xff]
        %v844 = vld [vmem:[%s825 + $0xd8] sm:$0xff]
        %v845 = vld [vmem:[%s825 + $0xe0] sm:$0xff]
        %v846 = vld [vmem:[%s825 + $0xf0] sm:$0xff]
        %v847 = vld [vmem:[%s825 + $0xf8] sm:$0xff]
        %v848 = vld [vmem:[%s825 + $0x108] sm:$0xff]
        %v849 = vld [vmem:[%s825 + $0x110] sm:$0xff]
        %v850 = vld [vmem:[%s825 + $0x120] sm:$0xff]
        %v851 = vld [vmem:[%s825 + $0x128] sm:$0xff]
        %v852 = vld [vmem:[%s825 + $0x138] sm:$0xff]
        %v853 = vld [vmem:[%s825 + $0x140] sm:$0xff]
        %v854 = vld [vmem:[%s825 + $0x150] sm:$0xff]
        %v855 = vld [vmem:[%s825 + $0x158] sm:$0xff]
        %v856 = vld [vmem:[%s825 + $0x168] sm:$0xff]
        %v857 = vld [vmem:[%s825 + $0x170] sm:$0xff]
        %v858 = vlaneseq
        %v859 = vshrl.u32 %v858, 7
        %v860 = vsub.s32 6, %v859
        %v861 = vrot.slane %v253, %v860
        %v862 = vmul.f32 %v826, %v861
        %v863 = vmul.f32 %v827, %v861
        %v864 = vmul.f32 %v828, %v861
        %v865 = vmul.f32 %v829, %v861
        %v866 = vmul.f32 %v830, %v861
        %v867 = vmul.f32 %v831, %v861
        %v868 = vmul.f32 %v832, %v861
        %v869 = vmul.f32 %v833, %v861
        %v870 = vmul.f32 %v834, %v861
        %v871 = vmul.f32 %v835, %v861
        %v872 = vmul.f32 %v836, %v861
        %v873 = vmul.f32 %v837, %v861
        %v874 = vmul.f32 %v838, %v861
        %v875 = vmul.f32 %v839, %v861
        %v876 = vmul.f32 %v840, %v861
        %v877 = vmul.f32 %v841, %v861
        %v878 = vmul.f32 %v842, %v861
        %v879 = vmul.f32 %v843, %v861
        %v880 = vmul.f32 %v844, %v861
        %v881 = vmul.f32 %v845, %v861
        %v882 = vmul.f32 %v846, %v861
        %v883 = vmul.f32 %v847, %v861
        %v884 = vmul.f32 %v848, %v861
        %v885 = vmul.f32 %v849, %v861
        %v886 = vmul.f32 %v850, %v861
        %v887 = vmul.f32 %v851, %v861
        %v888 = vmul.f32 %v852, %v861
        %v889 = vmul.f32 %v853, %v861
        %v890 = vmul.f32 %v854, %v861
        %v891 = vmul.f32 %v855, %v861
        %v892 = vmul.f32 %v856, %v861
        %v893 = vmul.f32 %v857, %v861
        %v894 = vadd.f32 %v793, %v862
        %v895 = vadd.f32 %v794, %v863
        %v896 = vadd.f32 %v795, %v864
        %v897 = vadd.f32 %v796, %v865
        %v898 = vadd.f32 %v797, %v866
        %v899 = vadd.f32 %v798, %v867
        %v900 = vadd.f32 %v799, %v868
        %v901 = vadd.f32 %v800, %v869
        %v902 = vadd.f32 %v801, %v870
        %v903 = vadd.f32 %v802, %v871
        %v904 = vadd.f32 %v803, %v872
        %v905 = vadd.f32 %v804, %v873
        %v906 = vadd.f32 %v805, %v874
        %v907 = vadd.f32 %v806, %v875
        %v908 = vadd.f32 %v807, %v876
        %v909 = vadd.f32 %v808, %v877
        %v910 = vadd.f32 %v809, %v878
        %v911 = vadd.f32 %v810, %v879
        %v912 = vadd.f32 %v811, %v880
        %v913 = vadd.f32 %v812, %v881
        %v914 = vadd.f32 %v813, %v882
        %v915 = vadd.f32 %v814, %v883
        %v916 = vadd.f32 %v815, %v884
        %v917 = vadd.f32 %v816, %v885
        %v918 = vadd.f32 %v817, %v886
        %v919 = vadd.f32 %v818, %v887
        %v920 = vadd.f32 %v819, %v888
        %v921 = vadd.f32 %v820, %v889
        %v922 = vadd.f32 %v821, %v890
        %v923 = vadd.f32 %v822, %v891
        %v924 = vadd.f32 %v823, %v892
        %v925 = vadd.f32 %v824, %v893
        %v926 = vld [vmem:[%s825 + $0x1] sm:$0xff]
        %v927 = vld [vmem:[%s825 + $0x9] sm:$0xff]
        %v928 = vld [vmem:[%s825 + $0x19] sm:$0xff]
        %v929 = vld [vmem:[%s825 + $0x21] sm:$0xff]
        %v930 = vld [vmem:[%s825 + $0x31] sm:$0xff]
        %v931 = vld [vmem:[%s825 + $0x39] sm:$0xff]
        %v932 = vld [vmem:[%s825 + $0x49] sm:$0xff]
        %v933 = vld [vmem:[%s825 + $0x51] sm:$0xff]
        %v934 = vld [vmem:[%s825 + $0x61] sm:$0xff]
        %v935 = vld [vmem:[%s825 + $0x69] sm:$0xff]
        %v936 = vld [vmem:[%s825 + $0x79] sm:$0xff]
        %v937 = vld [vmem:[%s825 + $0x81] sm:$0xff]
        %v938 = vld [vmem:[%s825 + $0x91] sm:$0xff]
        %v939 = vld [vmem:[%s825 + $0x99] sm:$0xff]
        %v940 = vld [vmem:[%s825 + $0xa9] sm:$0xff]
        %v941 = vld [vmem:[%s825 + $0xb1] sm:$0xff]
        %v942 = vld [vmem:[%s825 + $0xc1] sm:$0xff]
        %v943 = vld [vmem:[%s825 + $0xc9] sm:$0xff]
        %v944 = vld [vmem:[%s825 + $0xd9] sm:$0xff]
        %v945 = vld [vmem:[%s825 + $0xe1] sm:$0xff]
        %v946 = vld [vmem:[%s825 + $0xf1] sm:$0xff]
        %v947 = vld [vmem:[%s825 + $0xf9] sm:$0xff]
        %v948 = vld [vmem:[%s825 + $0x109] sm:$0xff]
        %v949 = vld [vmem:[%s825 + $0x111] sm:$0xff]
        %v950 = vld [vmem:[%s825 + $0x121] sm:$0xff]
        %v951 = vld [vmem:[%s825 + $0x129] sm:$0xff]
        %v952 = vld [vmem:[%s825 + $0x139] sm:$0xff]
        %v953 = vld [vmem:[%s825 + $0x141] sm:$0xff]
        %v954 = vld [vmem:[%s825 + $0x151] sm:$0xff]
        %v955 = vld [vmem:[%s825 + $0x159] sm:$0xff]
        %v956 = vld [vmem:[%s825 + $0x169] sm:$0xff]
        %v957 = vld [vmem:[%s825 + $0x171] sm:$0xff]
        %v958 = vlaneseq
        %v959 = vshrl.u32 %v958, 7
        %v960 = vsub.s32 7, %v959
        %v961 = vrot.slane %v253, %v960
        %v962 = vmul.f32 %v926, %v961
        %v963 = vmul.f32 %v927, %v961
        %v964 = vmul.f32 %v928, %v961
        %v965 = vmul.f32 %v929, %v961
        %v966 = vmul.f32 %v930, %v961
        %v967 = vmul.f32 %v931, %v961
        %v968 = vmul.f32 %v932, %v961
        %v969 = vmul.f32 %v933, %v961
        %v970 = vmul.f32 %v934, %v961
        %v971 = vmul.f32 %v935, %v961
        %v972 = vmul.f32 %v936, %v961
        %v973 = vmul.f32 %v937, %v961
        %v974 = vmul.f32 %v938, %v961
        %v975 = vmul.f32 %v939, %v961
        %v976 = vmul.f32 %v940, %v961
        %v977 = vmul.f32 %v941, %v961
        %v978 = vmul.f32 %v942, %v961
        %v979 = vmul.f32 %v943, %v961
        %v980 = vmul.f32 %v944, %v961
        %v981 = vmul.f32 %v945, %v961
        %v982 = vmul.f32 %v946, %v961
        %v983 = vmul.f32 %v947, %v961
        %v984 = vmul.f32 %v948, %v961
        %v985 = vmul.f32 %v949, %v961
        %v986 = vmul.f32 %v950, %v961
        %v987 = vmul.f32 %v951, %v961
        %v988 = vmul.f32 %v952, %v961
        %v989 = vmul.f32 %v953, %v961
        %v990 = vmul.f32 %v954, %v961
        %v991 = vmul.f32 %v955, %v961
        %v992 = vmul.f32 %v956, %v961
        %v993 = vmul.f32 %v957, %v961
        %v994 = vadd.f32 %v894, %v962
        %v995 = vadd.f32 %v895, %v963
        %v996 = vadd.f32 %v896, %v964
        %v997 = vadd.f32 %v897, %v965
        %v998 = vadd.f32 %v898, %v966
        %v999 = vadd.f32 %v899, %v967
        %v1000 = vadd.f32 %v900, %v968
        %v1001 = vadd.f32 %v901, %v969
        %v1002 = vadd.f32 %v902, %v970
        %v1003 = vadd.f32 %v903, %v971
        %v1004 = vadd.f32 %v904, %v972
        %v1005 = vadd.f32 %v905, %v973
        %v1006 = vadd.f32 %v906, %v974
        %v1007 = vadd.f32 %v907, %v975
        %v1008 = vadd.f32 %v908, %v976
        %v1009 = vadd.f32 %v909, %v977
        %v1010 = vadd.f32 %v910, %v978
        %v1011 = vadd.f32 %v911, %v979
        %v1012 = vadd.f32 %v912, %v980
        %v1013 = vadd.f32 %v913, %v981
        %v1014 = vadd.f32 %v914, %v982
        %v1015 = vadd.f32 %v915, %v983
        %v1016 = vadd.f32 %v916, %v984
        %v1017 = vadd.f32 %v917, %v985
        %v1018 = vadd.f32 %v918, %v986
        %v1019 = vadd.f32 %v919, %v987
        %v1020 = vadd.f32 %v920, %v988
        %v1021 = vadd.f32 %v921, %v989
        %v1022 = vadd.f32 %v922, %v990
        %v1023 = vadd.f32 %v923, %v991
        %v1024 = vadd.f32 %v924, %v992
        %v1025 = vadd.f32 %v925, %v993
        %v1026 = vld [vmem:[%s825 + $0x2] sm:$0xff]
        %v1027 = vld [vmem:[%s825 + $0xa] sm:$0xff]
        %v1028 = vld [vmem:[%s825 + $0x1a] sm:$0xff]
        %v1029 = vld [vmem:[%s825 + $0x22] sm:$0xff]
        %v1030 = vld [vmem:[%s825 + $0x32] sm:$0xff]
        %v1031 = vld [vmem:[%s825 + $0x3a] sm:$0xff]
        %v1032 = vld [vmem:[%s825 + $0x4a] sm:$0xff]
        %v1033 = vld [vmem:[%s825 + $0x52] sm:$0xff]
        %v1034 = vld [vmem:[%s825 + $0x62] sm:$0xff]
        %v1035 = vld [vmem:[%s825 + $0x6a] sm:$0xff]
        %v1036 = vld [vmem:[%s825 + $0x7a] sm:$0xff]
        %v1037 = vld [vmem:[%s825 + $0x82] sm:$0xff]
        %v1038 = vld [vmem:[%s825 + $0x92] sm:$0xff]
        %v1039 = vld [vmem:[%s825 + $0x9a] sm:$0xff]
        %v1040 = vld [vmem:[%s825 + $0xaa] sm:$0xff]
        %v1041 = vld [vmem:[%s825 + $0xb2] sm:$0xff]
        %v1042 = vld [vmem:[%s825 + $0xc2] sm:$0xff]
        %v1043 = vld [vmem:[%s825 + $0xca] sm:$0xff]
        %v1044 = vld [vmem:[%s825 + $0xda] sm:$0xff]
        %v1045 = vld [vmem:[%s825 + $0xe2] sm:$0xff]
        %v1046 = vld [vmem:[%s825 + $0xf2] sm:$0xff]
        %v1047 = vld [vmem:[%s825 + $0xfa] sm:$0xff]
        %v1048 = vld [vmem:[%s825 + $0x10a] sm:$0xff]
        %v1049 = vld [vmem:[%s825 + $0x112] sm:$0xff]
        %v1050 = vld [vmem:[%s825 + $0x122] sm:$0xff]
        %v1051 = vld [vmem:[%s825 + $0x12a] sm:$0xff]
        %v1052 = vld [vmem:[%s825 + $0x13a] sm:$0xff]
        %v1053 = vld [vmem:[%s825 + $0x142] sm:$0xff]
        %v1054 = vld [vmem:[%s825 + $0x152] sm:$0xff]
        %v1055 = vld [vmem:[%s825 + $0x15a] sm:$0xff]
        %v1056 = vld [vmem:[%s825 + $0x16a] sm:$0xff]
        %v1057 = vld [vmem:[%s825 + $0x172] sm:$0xff]
        %v1058 = vlaneseq
        %v1059 = vshrl.u32 %v1058, 7
        %v1060 = vsub.s32 0, %v1059
        %v1061 = vrot.slane %v254, %v1060
        %v1062 = vmul.f32 %v1026, %v1061
        %v1063 = vmul.f32 %v1027, %v1061
        %v1064 = vmul.f32 %v1028, %v1061
        %v1065 = vmul.f32 %v1029, %v1061
        %v1066 = vmul.f32 %v1030, %v1061
        %v1067 = vmul.f32 %v1031, %v1061
        %v1068 = vmul.f32 %v1032, %v1061
        %v1069 = vmul.f32 %v1033, %v1061
        %v1070 = vmul.f32 %v1034, %v1061
        %v1071 = vmul.f32 %v1035, %v1061
        %v1072 = vmul.f32 %v1036, %v1061
        %v1073 = vmul.f32 %v1037, %v1061
        %v1074 = vmul.f32 %v1038, %v1061
        %v1075 = vmul.f32 %v1039, %v1061
        %v1076 = vmul.f32 %v1040, %v1061
        %v1077 = vmul.f32 %v1041, %v1061
        %v1078 = vmul.f32 %v1042, %v1061
        %v1079 = vmul.f32 %v1043, %v1061
        %v1080 = vmul.f32 %v1044, %v1061
        %v1081 = vmul.f32 %v1045, %v1061
        %v1082 = vmul.f32 %v1046, %v1061
        %v1083 = vmul.f32 %v1047, %v1061
        %v1084 = vmul.f32 %v1048, %v1061
        %v1085 = vmul.f32 %v1049, %v1061
        %v1086 = vmul.f32 %v1050, %v1061
        %v1087 = vmul.f32 %v1051, %v1061
        %v1088 = vmul.f32 %v1052, %v1061
        %v1089 = vmul.f32 %v1053, %v1061
        %v1090 = vmul.f32 %v1054, %v1061
        %v1091 = vmul.f32 %v1055, %v1061
        %v1092 = vmul.f32 %v1056, %v1061
        %v1093 = vmul.f32 %v1057, %v1061
        %v1094 = vadd.f32 %v994, %v1062
        %v1095 = vadd.f32 %v995, %v1063
        %v1096 = vadd.f32 %v996, %v1064
        %v1097 = vadd.f32 %v997, %v1065
        %v1098 = vadd.f32 %v998, %v1066
        %v1099 = vadd.f32 %v999, %v1067
        %v1100 = vadd.f32 %v1000, %v1068
        %v1101 = vadd.f32 %v1001, %v1069
        %v1102 = vadd.f32 %v1002, %v1070
        %v1103 = vadd.f32 %v1003, %v1071
        %v1104 = vadd.f32 %v1004, %v1072
        %v1105 = vadd.f32 %v1005, %v1073
        %v1106 = vadd.f32 %v1006, %v1074
        %v1107 = vadd.f32 %v1007, %v1075
        %v1108 = vadd.f32 %v1008, %v1076
        %v1109 = vadd.f32 %v1009, %v1077
        %v1110 = vadd.f32 %v1010, %v1078
        %v1111 = vadd.f32 %v1011, %v1079
        %v1112 = vadd.f32 %v1012, %v1080
        %v1113 = vadd.f32 %v1013, %v1081
        %v1114 = vadd.f32 %v1014, %v1082
        %v1115 = vadd.f32 %v1015, %v1083
        %v1116 = vadd.f32 %v1016, %v1084
        %v1117 = vadd.f32 %v1017, %v1085
        %v1118 = vadd.f32 %v1018, %v1086
        %v1119 = vadd.f32 %v1019, %v1087
        %v1120 = vadd.f32 %v1020, %v1088
        %v1121 = vadd.f32 %v1021, %v1089
        %v1122 = vadd.f32 %v1022, %v1090
        %v1123 = vadd.f32 %v1023, %v1091
        %v1124 = vadd.f32 %v1024, %v1092
        %v1125 = vadd.f32 %v1025, %v1093
        %v1127 = vlaneseq
        %v1128 = vshrl.u32 %v1127, 7
        %v1129 = vsub.s32 0, %v1128
        %v1130 = vrot.slane %v255, %v1129
        %v1132 = vadd.f32 %v1094, %v1130
        %v1133 = vadd.f32 %v1095, %v1130
        %v1134 = vadd.f32 %v1096, %v1130
        %v1135 = vadd.f32 %v1097, %v1130
        %v1136 = vadd.f32 %v1098, %v1130
        %v1137 = vadd.f32 %v1099, %v1130
        %v1138 = vadd.f32 %v1100, %v1130
        %v1139 = vadd.f32 %v1101, %v1130
        %v1140 = vadd.f32 %v1102, %v1130
        %v1141 = vadd.f32 %v1103, %v1130
        %v1142 = vadd.f32 %v1104, %v1130
        %v1143 = vadd.f32 %v1105, %v1130
        %v1144 = vadd.f32 %v1106, %v1130
        %v1145 = vadd.f32 %v1107, %v1130
        %v1146 = vadd.f32 %v1108, %v1130
        %v1147 = vadd.f32 %v1109, %v1130
        %v1148 = vadd.f32 %v1110, %v1130
        %v1149 = vadd.f32 %v1111, %v1130
        %v1150 = vadd.f32 %v1112, %v1130
        %v1151 = vadd.f32 %v1113, %v1130
        %v1152 = vadd.f32 %v1114, %v1130
        %v1153 = vadd.f32 %v1115, %v1130
        %v1154 = vadd.f32 %v1116, %v1130
        %v1155 = vadd.f32 %v1117, %v1130
        %v1156 = vadd.f32 %v1118, %v1130
        %v1157 = vadd.f32 %v1119, %v1130
        %v1158 = vadd.f32 %v1120, %v1130
        %v1159 = vadd.f32 %v1121, %v1130
        %v1160 = vadd.f32 %v1122, %v1130
        %v1161 = vadd.f32 %v1123, %v1130
        %v1162 = vadd.f32 %v1124, %v1130
        %v1163 = vadd.f32 %v1125, %v1130
        %v1164 = vxor.u32 %v1132, 2147483648
        %v1165 = vxor.u32 %v1133, 2147483648
        %v1166 = vxor.u32 %v1134, 2147483648
        %v1167 = vxor.u32 %v1135, 2147483648
        %v1168 = vxor.u32 %v1136, 2147483648
        %v1169 = vxor.u32 %v1137, 2147483648
        %v1170 = vxor.u32 %v1138, 2147483648
        %v1171 = vxor.u32 %v1139, 2147483648
        %v1172 = vxor.u32 %v1140, 2147483648
        %v1173 = vxor.u32 %v1141, 2147483648
        %v1174 = vxor.u32 %v1142, 2147483648
        %v1175 = vxor.u32 %v1143, 2147483648
        %v1176 = vxor.u32 %v1144, 2147483648
        %v1177 = vxor.u32 %v1145, 2147483648
        %v1178 = vxor.u32 %v1146, 2147483648
        %v1179 = vxor.u32 %v1147, 2147483648
        %v1180 = vxor.u32 %v1148, 2147483648
        %v1181 = vxor.u32 %v1149, 2147483648
        %v1182 = vxor.u32 %v1150, 2147483648
        %v1183 = vxor.u32 %v1151, 2147483648
        %v1184 = vxor.u32 %v1152, 2147483648
        %v1185 = vxor.u32 %v1153, 2147483648
        %v1186 = vxor.u32 %v1154, 2147483648
        %v1187 = vxor.u32 %v1155, 2147483648
        %v1188 = vxor.u32 %v1156, 2147483648
        %v1189 = vxor.u32 %v1157, 2147483648
        %v1190 = vxor.u32 %v1158, 2147483648
        %v1191 = vxor.u32 %v1159, 2147483648
        %v1192 = vxor.u32 %v1160, 2147483648
        %v1193 = vxor.u32 %v1161, 2147483648
        %v1194 = vxor.u32 %v1162, 2147483648
        %v1195 = vxor.u32 %v1163, 2147483648
        %v1196 = vmul.f32 %v1164, 1.442695
        %v1197 = vpow.pop %v1196
        %v1198 = vmul.f32 %v1165, 1.442695
        %v1199 = vpow.pop %v1198
        %v1200 = vmul.f32 %v1166, 1.442695
        %v1201 = vpow.pop %v1200
        %v1202 = vmul.f32 %v1167, 1.442695
        %v1203 = vpow.pop %v1202
        %v1204 = vmul.f32 %v1168, 1.442695
        %v1205 = vpow.pop %v1204
        %v1206 = vmul.f32 %v1169, 1.442695
        %v1207 = vpow.pop %v1206
        %v1208 = vmul.f32 %v1170, 1.442695
        %v1209 = vpow.pop %v1208
        %v1210 = vmul.f32 %v1171, 1.442695
        %v1211 = vpow.pop %v1210
        %v1212 = vmul.f32 %v1172, 1.442695
        %v1213 = vpow.pop %v1212
        %v1214 = vmul.f32 %v1173, 1.442695
        %v1215 = vpow.pop %v1214
        %v1216 = vmul.f32 %v1174, 1.442695
        %v1217 = vpow.pop %v1216
        %v1218 = vmul.f32 %v1175, 1.442695
        %v1219 = vpow.pop %v1218
        %v1220 = vmul.f32 %v1176, 1.442695
        %v1221 = vpow.pop %v1220
        %v1222 = vmul.f32 %v1177, 1.442695
        %v1223 = vpow.pop %v1222
        %v1224 = vmul.f32 %v1178, 1.442695
        %v1225 = vpow.pop %v1224
        %v1226 = vmul.f32 %v1179, 1.442695
        %v1227 = vpow.pop %v1226
        %v1228 = vmul.f32 %v1180, 1.442695
        %v1229 = vpow.pop %v1228
        %v1230 = vmul.f32 %v1181, 1.442695
        %v1231 = vpow.pop %v1230
        %v1232 = vmul.f32 %v1182, 1.442695
        %v1233 = vpow.pop %v1232
        %v1234 = vmul.f32 %v1183, 1.442695
        %v1235 = vpow.pop %v1234
        %v1236 = vmul.f32 %v1184, 1.442695
        %v1237 = vpow.pop %v1236
        %v1238 = vmul.f32 %v1185, 1.442695
        %v1239 = vpow.pop %v1238
        %v1240 = vmul.f32 %v1186, 1.442695
        %v1241 = vpow.pop %v1240
        %v1242 = vmul.f32 %v1187, 1.442695
        %v1243 = vpow.pop %v1242
        %v1244 = vmul.f32 %v1188, 1.442695
        %v1245 = vpow.pop %v1244
        %v1246 = vmul.f32 %v1189, 1.442695
        %v1247 = vpow.pop %v1246
        %v1248 = vmul.f32 %v1190, 1.442695
        %v1249 = vpow.pop %v1248
        %v1250 = vmul.f32 %v1191, 1.442695
        %v1251 = vpow.pop %v1250
        %v1252 = vmul.f32 %v1192, 1.442695
        %v1253 = vpow.pop %v1252
        %v1254 = vmul.f32 %v1193, 1.442695
        %v1255 = vpow.pop %v1254
        %v1256 = vmul.f32 %v1194, 1.442695
        %v1257 = vpow.pop %v1256
        %v1258 = vmul.f32 %v1195, 1.442695
        %v1259 = vpow.pop %v1258
        %v1260 = vadd.f32 %v1197, 1.0
        %v1261 = vadd.f32 %v1199, 1.0
        %v1262 = vadd.f32 %v1201, 1.0
        %v1263 = vadd.f32 %v1203, 1.0
        %v1264 = vadd.f32 %v1205, 1.0
        %v1265 = vadd.f32 %v1207, 1.0
        %v1266 = vadd.f32 %v1209, 1.0
        %v1267 = vadd.f32 %v1211, 1.0
        %v1268 = vadd.f32 %v1213, 1.0
        %v1269 = vadd.f32 %v1215, 1.0
        %v1270 = vadd.f32 %v1217, 1.0
        %v1271 = vadd.f32 %v1219, 1.0
        %v1272 = vadd.f32 %v1221, 1.0
        %v1273 = vadd.f32 %v1223, 1.0
        %v1274 = vadd.f32 %v1225, 1.0
        %v1275 = vadd.f32 %v1227, 1.0
        %v1276 = vadd.f32 %v1229, 1.0
        %v1277 = vadd.f32 %v1231, 1.0
        %v1278 = vadd.f32 %v1233, 1.0
        %v1279 = vadd.f32 %v1235, 1.0
        %v1280 = vadd.f32 %v1237, 1.0
        %v1281 = vadd.f32 %v1239, 1.0
        %v1282 = vadd.f32 %v1241, 1.0
        %v1283 = vadd.f32 %v1243, 1.0
        %v1284 = vadd.f32 %v1245, 1.0
        %v1285 = vadd.f32 %v1247, 1.0
        %v1286 = vadd.f32 %v1249, 1.0
        %v1287 = vadd.f32 %v1251, 1.0
        %v1288 = vadd.f32 %v1253, 1.0
        %v1289 = vadd.f32 %v1255, 1.0
        %v1290 = vadd.f32 %v1257, 1.0
        %v1291 = vadd.f32 %v1259, 1.0
        %v1292 = vrcp.pop %v1260
        %v1293 = vmul.f32 1.0, %v1292
        %v1294 = vrcp.pop %v1261
        %v1295 = vmul.f32 1.0, %v1294
        %v1296 = vrcp.pop %v1262
        %v1297 = vmul.f32 1.0, %v1296
        %v1298 = vrcp.pop %v1263
        %v1299 = vmul.f32 1.0, %v1298
        %v1300 = vrcp.pop %v1264
        %v1301 = vmul.f32 1.0, %v1300
        %v1302 = vrcp.pop %v1265
        %v1303 = vmul.f32 1.0, %v1302
        %v1304 = vrcp.pop %v1266
        %v1305 = vmul.f32 1.0, %v1304
        %v1306 = vrcp.pop %v1267
        %v1307 = vmul.f32 1.0, %v1306
        %v1308 = vrcp.pop %v1268
        %v1309 = vmul.f32 1.0, %v1308
        %v1310 = vrcp.pop %v1269
        %v1311 = vmul.f32 1.0, %v1310
        %v1312 = vrcp.pop %v1270
        %v1313 = vmul.f32 1.0, %v1312
        %v1314 = vrcp.pop %v1271
        %v1315 = vmul.f32 1.0, %v1314
        %v1316 = vrcp.pop %v1272
        %v1317 = vmul.f32 1.0, %v1316
        %v1318 = vrcp.pop %v1273
        %v1319 = vmul.f32 1.0, %v1318
        %v1320 = vrcp.pop %v1274
        %v1321 = vmul.f32 1.0, %v1320
        %v1322 = vrcp.pop %v1275
        %v1323 = vmul.f32 1.0, %v1322
        %v1324 = vrcp.pop %v1276
        %v1325 = vmul.f32 1.0, %v1324
        %v1326 = vrcp.pop %v1277
        %v1327 = vmul.f32 1.0, %v1326
        %v1328 = vrcp.pop %v1278
        %v1329 = vmul.f32 1.0, %v1328
        %v1330 = vrcp.pop %v1279
        %v1331 = vmul.f32 1.0, %v1330
        %v1332 = vrcp.pop %v1280
        %v1333 = vmul.f32 1.0, %v1332
        %v1334 = vrcp.pop %v1281
        %v1335 = vmul.f32 1.0, %v1334
        %v1336 = vrcp.pop %v1282
        %v1337 = vmul.f32 1.0, %v1336
        %v1338 = vrcp.pop %v1283
        %v1339 = vmul.f32 1.0, %v1338
        %v1340 = vrcp.pop %v1284
        %v1341 = vmul.f32 1.0, %v1340
        %v1342 = vrcp.pop %v1285
        %v1343 = vmul.f32 1.0, %v1342
        %v1344 = vrcp.pop %v1286
        %v1345 = vmul.f32 1.0, %v1344
        %v1346 = vrcp.pop %v1287
        %v1347 = vmul.f32 1.0, %v1346
        %v1348 = vrcp.pop %v1288
        %v1349 = vmul.f32 1.0, %v1348
        %v1350 = vrcp.pop %v1289
        %v1351 = vmul.f32 1.0, %v1350
        %v1352 = vrcp.pop %v1290
        %v1353 = vmul.f32 1.0, %v1352
        %v1354 = vrcp.pop %v1291
        %v1355 = vmul.f32 1.0, %v1354
        %v1356 = vmul.f32 %v1132, %v1293
        %v1357 = vmul.f32 %v1133, %v1295
        %v1358 = vmul.f32 %v1134, %v1297
        %v1359 = vmul.f32 %v1135, %v1299
        %v1360 = vmul.f32 %v1136, %v1301
        %v1361 = vmul.f32 %v1137, %v1303
        %v1362 = vmul.f32 %v1138, %v1305
        %v1363 = vmul.f32 %v1139, %v1307
        %v1364 = vmul.f32 %v1140, %v1309
        %v1365 = vmul.f32 %v1141, %v1311
        %v1366 = vmul.f32 %v1142, %v1313
        %v1367 = vmul.f32 %v1143, %v1315
        %v1368 = vmul.f32 %v1144, %v1317
        %v1369 = vmul.f32 %v1145, %v1319
        %v1370 = vmul.f32 %v1146, %v1321
        %v1371 = vmul.f32 %v1147, %v1323
        %v1372 = vmul.f32 %v1148, %v1325
        %v1373 = vmul.f32 %v1149, %v1327
        %v1374 = vmul.f32 %v1150, %v1329
        %v1375 = vmul.f32 %v1151, %v1331
        %v1376 = vmul.f32 %v1152, %v1333
        %v1377 = vmul.f32 %v1153, %v1335
        %v1378 = vmul.f32 %v1154, %v1337
        %v1379 = vmul.f32 %v1155, %v1339
        %v1380 = vmul.f32 %v1156, %v1341
        %v1381 = vmul.f32 %v1157, %v1343
        %v1382 = vmul.f32 %v1158, %v1345
        %v1383 = vmul.f32 %v1159, %v1347
        %v1384 = vmul.f32 %v1160, %v1349
        %v1385 = vmul.f32 %v1161, %v1351
        %v1386 = vmul.f32 %v1162, %v1353
        %v1387 = vmul.f32 %v1163, %v1355
        %v1388 = vpack.c.bf16 %v1357, %v1356
        %v1389 = vpack.c.bf16 %v1359, %v1358
        %v1390 = vpack.c.bf16 %v1361, %v1360
        %v1391 = vpack.c.bf16 %v1363, %v1362
        %v1392 = vpack.c.bf16 %v1365, %v1364
        %v1393 = vpack.c.bf16 %v1367, %v1366
        %v1394 = vpack.c.bf16 %v1369, %v1368
        %v1395 = vpack.c.bf16 %v1371, %v1370
        %v1396 = vpack.c.bf16 %v1373, %v1372
        %v1397 = vpack.c.bf16 %v1375, %v1374
        %v1398 = vpack.c.bf16 %v1377, %v1376
        %v1399 = vpack.c.bf16 %v1379, %v1378
        %v1400 = vpack.c.bf16 %v1381, %v1380
        %v1401 = vpack.c.bf16 %v1383, %v1382
        %v1402 = vpack.c.bf16 %v1385, %v1384
        %v1403 = vpack.c.bf16 %v1387, %v1386
        %v1404 = vld [vmem:[%s3] sm:$0xf]
        %v1405 = vld [vmem:[%s3 + $0x4] sm:$0xf]
        %v1406 = vld [vmem:[%s3 + $0x8] sm:$0xf]
        %v1407 = vld [vmem:[%s3 + $0xc] sm:$0xf]
        %v1408 = vld [vmem:[%s3 + $0x10] sm:$0xf]
        %v1409 = vld [vmem:[%s3 + $0x14] sm:$0xf]
        %v1410 = vld [vmem:[%s3 + $0x18] sm:$0xf]
        %v1411 = vld [vmem:[%s3 + $0x1c] sm:$0xf]
        %v1412 = vld [vmem:[%s3 + $0x20] sm:$0xf]
        %v1413 = vld [vmem:[%s3 + $0x24] sm:$0xf]
        %v1414 = vld [vmem:[%s3 + $0x28] sm:$0xf]
        %v1415 = vld [vmem:[%s3 + $0x2c] sm:$0xf]
        %v1416 = vld [vmem:[%s3 + $0x30] sm:$0xf]
        %v1417 = vld [vmem:[%s3 + $0x34] sm:$0xf]
        %v1418 = vld [vmem:[%s3 + $0x38] sm:$0xf]
        %v1419 = vld [vmem:[%s3 + $0x3c] sm:$0xf]
        %v1420 = vld [vmem:[%s4] sm:$0x1]
        %v1422 = vlaneseq
        %v1423 = vshrl.u32 %v1422, 7
        %v1424 = vsub.s32 0, %v1423
        %v1425 = vrot.slane %v1420, %v1424
        %v1443 = vunpack.c.l.b16 %v1404
        %v1444 = vunpack.c.l.b16 %v1405
        %v1445 = vunpack.c.l.b16 %v1406
        %v1446 = vunpack.c.l.b16 %v1407
        %v1447 = vunpack.c.l.b16 %v1408
        %v1448 = vunpack.c.l.b16 %v1409
        %v1449 = vunpack.c.l.b16 %v1410
        %v1450 = vunpack.c.l.b16 %v1411
        %v1451 = vunpack.c.l.b16 %v1412
        %v1452 = vunpack.c.l.b16 %v1413
        %v1453 = vunpack.c.l.b16 %v1414
        %v1454 = vunpack.c.l.b16 %v1415
        %v1455 = vunpack.c.l.b16 %v1416
        %v1456 = vunpack.c.l.b16 %v1417
        %v1457 = vunpack.c.l.b16 %v1418
        %v1458 = vunpack.c.l.b16 %v1419
        %v1459 = vpack.c.b16 %v1444, %v1443
        %v1460 = vpack.c.b16 %v1446, %v1445
        %v1461 = vpack.c.b16 %v1448, %v1447
        %v1462 = vpack.c.b16 %v1450, %v1449
        %v1463 = vpack.c.b16 %v1452, %v1451
        %v1464 = vpack.c.b16 %v1454, %v1453
        %v1465 = vpack.c.b16 %v1456, %v1455
        %v1466 = vpack.c.b16 %v1458, %v1457
        %1475 = vmatprep.subr.bf16.mxu0 0
        %1476 = vmatpush1.bf16.msra.mxu0 %v1466
        %1477 = vmatprep.subr.bf16.mxu0 0
        %1478 = vmatpush1.bf16.msra.mxu0 %v1465
        %1479 = vmatprep.subr.bf16.mxu0 0
        %1480 = vmatpush1.bf16.msra.mxu0 %v1464
        %1481 = vmatprep.subr.bf16.mxu0 0
        %1482 = vmatpush1.bf16.msra.mxu0 %v1463
        %1483 = vmatprep.subr.bf16.mxu0 0
        %1484 = vmatpush1.bf16.msra.mxu0 %v1462
        %1485 = vmatprep.subr.bf16.mxu0 0
        %1486 = vmatpush1.bf16.msra.mxu0 %v1461
        %1487 = vmatprep.subr.bf16.mxu0 0
        %1488 = vmatpush1.bf16.msra.mxu0 %v1460
        %1489 = vmatprep.subr.bf16.mxu0 0
        %1490 = vmatpush1.bf16.msra.mxu0 %v1459
        %1491 = vmatprep.subr.bf16.mxu0 0
        %1492 = vmatpush2.bf16.msra.mxu0 0
        %1493 = vmatprep.subr.bf16.mxu0 0
        %1494 = vmatpush2.bf16.msra.mxu0 0
        %1495 = vmatprep.subr.bf16.mxu0 0
        %1496 = vmatpush2.bf16.msra.mxu0 0
        %1497 = vmatprep.subr.bf16.mxu0 0
        %1498 = vmatpush2.bf16.msra.mxu0 0
        %1499 = vmatprep.subr.bf16.mxu0 0
        %1500 = vmatpush2.bf16.msra.mxu0 0
        %1501 = vmatprep.subr.bf16.mxu0 0
        %1502 = vmatpush2.bf16.msra.mxu0 0
        %1503 = vmatprep.subr.bf16.mxu0 0
        %1504 = vmatpush2.bf16.msra.mxu0 0
        %1505 = vmatprep.subr.bf16.mxu0 0
        %1506 = vmatpush2.bf16.msra.mxu0 0
        %1507 = vmatprep.mubr.bf16.mxu0 0
        %1508 = vmatmul.mubr.bf16.gmra.mxu0 %v1388
        %v1509 = vpop.f32.mrf.mxu0
        %v1510 = vadd.f32 %v1425, %v1509
        %v1511 = vpop.f32.mrf.mxu0
        %v1512 = vpop.f32.mrf.mxu0
        %v1513 = vadd.f32 %v1425, %v1512
        %v1514 = vpop.f32.mrf.mxu0
        %1515 = vmatprep.mubr.bf16.mxu0 0
        %1516 = vmatmul.mubr.bf16.gmra.mxu0 %v1389
        %v1517 = vpop.f32.mrf.mxu0
        %v1518 = vadd.f32 %v1425, %v1517
        %v1519 = vpop.f32.mrf.mxu0
        %v1520 = vpop.f32.mrf.mxu0
        %v1521 = vadd.f32 %v1425, %v1520
        %v1522 = vpop.f32.mrf.mxu0
        %1523 = vmatprep.mubr.bf16.mxu0 0
        %1524 = vmatmul.mubr.bf16.gmra.mxu0 %v1390
        %v1525 = vpop.f32.mrf.mxu0
        %v1526 = vadd.f32 %v1425, %v1525
        %v1527 = vpop.f32.mrf.mxu0
        %v1528 = vpop.f32.mrf.mxu0
        %v1529 = vadd.f32 %v1425, %v1528
        %v1530 = vpop.f32.mrf.mxu0
        %1531 = vmatprep.mubr.bf16.mxu0 0
        %1532 = vmatmul.mubr.bf16.gmra.mxu0 %v1391
        %v1533 = vpop.f32.mrf.mxu0
        %v1534 = vadd.f32 %v1425, %v1533
        %v1535 = vpop.f32.mrf.mxu0
        %v1536 = vpop.f32.mrf.mxu0
        %v1537 = vadd.f32 %v1425, %v1536
        %v1538 = vpop.f32.mrf.mxu0
        %1539 = vmatprep.mubr.bf16.mxu0 0
        %1540 = vmatmul.mubr.bf16.gmra.mxu0 %v1392
        %v1541 = vpop.f32.mrf.mxu0
        %v1542 = vadd.f32 %v1425, %v1541
        %v1543 = vpop.f32.mrf.mxu0
        %v1544 = vpop.f32.mrf.mxu0
        %v1545 = vadd.f32 %v1425, %v1544
        %v1546 = vpop.f32.mrf.mxu0
        %1547 = vmatprep.mubr.bf16.mxu0 0
        %1548 = vmatmul.mubr.bf16.gmra.mxu0 %v1393
        %v1549 = vpop.f32.mrf.mxu0
        %v1550 = vadd.f32 %v1425, %v1549
        %v1551 = vpop.f32.mrf.mxu0
        %v1552 = vpop.f32.mrf.mxu0
        %v1553 = vadd.f32 %v1425, %v1552
        %v1554 = vpop.f32.mrf.mxu0
        %1555 = vmatprep.mubr.bf16.mxu0 0
        %1556 = vmatmul.mubr.bf16.gmra.mxu0 %v1394
        %v1557 = vpop.f32.mrf.mxu0
        %v1558 = vadd.f32 %v1425, %v1557
        %v1559 = vpop.f32.mrf.mxu0
        %v1560 = vpop.f32.mrf.mxu0
        %v1561 = vadd.f32 %v1425, %v1560
        %v1562 = vpop.f32.mrf.mxu0
        %1563 = vmatprep.mubr.bf16.mxu0 0
        %1564 = vmatmul.mubr.bf16.gmra.mxu0 %v1395
        %v1565 = vpop.f32.mrf.mxu0
        %v1566 = vadd.f32 %v1425, %v1565
        %v1567 = vpop.f32.mrf.mxu0
        %v1568 = vpop.f32.mrf.mxu0
        %v1569 = vadd.f32 %v1425, %v1568
        %v1570 = vpop.f32.mrf.mxu0
        %1571 = vmatprep.mubr.bf16.mxu0 0
        %1572 = vmatmul.mubr.bf16.gmra.mxu0 %v1396
        %v1573 = vpop.f32.mrf.mxu0
        %v1574 = vadd.f32 %v1425, %v1573
        %v1575 = vpop.f32.mrf.mxu0
        %v1576 = vpop.f32.mrf.mxu0
        %v1577 = vadd.f32 %v1425, %v1576
        %v1578 = vpop.f32.mrf.mxu0
        %1579 = vmatprep.mubr.bf16.mxu0 0
        %1580 = vmatmul.mubr.bf16.gmra.mxu0 %v1397
        %v1581 = vpop.f32.mrf.mxu0
        %v1582 = vadd.f32 %v1425, %v1581
        %v1583 = vpop.f32.mrf.mxu0
        %v1584 = vpop.f32.mrf.mxu0
        %v1585 = vadd.f32 %v1425, %v1584
        %v1586 = vpop.f32.mrf.mxu0
        %1587 = vmatprep.mubr.bf16.mxu0 0
        %1588 = vmatmul.mubr.bf16.gmra.mxu0 %v1398
        %v1589 = vpop.f32.mrf.mxu0
        %v1590 = vadd.f32 %v1425, %v1589
        %v1591 = vpop.f32.mrf.mxu0
        %v1592 = vpop.f32.mrf.mxu0
        %v1593 = vadd.f32 %v1425, %v1592
        %v1594 = vpop.f32.mrf.mxu0
        %1595 = vmatprep.mubr.bf16.mxu0 0
        %1596 = vmatmul.mubr.bf16.gmra.mxu0 %v1399
        %v1597 = vpop.f32.mrf.mxu0
        %v1598 = vadd.f32 %v1425, %v1597
        %v1599 = vpop.f32.mrf.mxu0
        %v1600 = vpop.f32.mrf.mxu0
        %v1601 = vadd.f32 %v1425, %v1600
        %v1602 = vpop.f32.mrf.mxu0
        %1603 = vmatprep.mubr.bf16.mxu0 0
        %1604 = vmatmul.mubr.bf16.gmra.mxu0 %v1400
        %v1605 = vpop.f32.mrf.mxu0
        %v1606 = vadd.f32 %v1425, %v1605
        %v1607 = vpop.f32.mrf.mxu0
        %v1608 = vpop.f32.mrf.mxu0
        %v1609 = vadd.f32 %v1425, %v1608
        %v1610 = vpop.f32.mrf.mxu0
        %1611 = vmatprep.mubr.bf16.mxu0 0
        %1612 = vmatmul.mubr.bf16.gmra.mxu0 %v1401
        %v1613 = vpop.f32.mrf.mxu0
        %v1614 = vadd.f32 %v1425, %v1613
        %v1615 = vpop.f32.mrf.mxu0
        %v1616 = vpop.f32.mrf.mxu0
        %v1617 = vadd.f32 %v1425, %v1616
        %v1618 = vpop.f32.mrf.mxu0
        %1619 = vmatprep.mubr.bf16.mxu0 0
        %1620 = vmatmul.mubr.bf16.gmra.mxu0 %v1402
        %v1621 = vpop.f32.mrf.mxu0
        %v1622 = vadd.f32 %v1425, %v1621
        %v1623 = vpop.f32.mrf.mxu0
        %v1624 = vpop.f32.mrf.mxu0
        %v1625 = vadd.f32 %v1425, %v1624
        %v1626 = vpop.f32.mrf.mxu0
        %1627 = vmatprep.mubr.bf16.mxu0 0
        %1628 = vmatmul.mubr.bf16.gmra.mxu0 %v1403
        %v1629 = vpop.f32.mrf.mxu0
        %v1630 = vadd.f32 %v1425, %v1629
        %v1631 = vpop.f32.mrf.mxu0
        %v1632 = vpop.f32.mrf.mxu0
        %v1633 = vadd.f32 %v1425, %v1632
        %v1634 = vpop.f32.mrf.mxu0
        %1635 = vdwg.mxu0
        %v1636 = vxor.u32 %v1510, 2147483648
        %v1637 = vxor.u32 %v1513, 2147483648
        %v1638 = vxor.u32 %v1518, 2147483648
        %v1639 = vxor.u32 %v1521, 2147483648
        %v1640 = vxor.u32 %v1526, 2147483648
        %v1641 = vxor.u32 %v1529, 2147483648
        %v1642 = vxor.u32 %v1534, 2147483648
        %v1643 = vxor.u32 %v1537, 2147483648
        %v1644 = vxor.u32 %v1542, 2147483648
        %v1645 = vxor.u32 %v1545, 2147483648
        %v1646 = vxor.u32 %v1550, 2147483648
        %v1647 = vxor.u32 %v1553, 2147483648
        %v1648 = vxor.u32 %v1558, 2147483648
        %v1649 = vxor.u32 %v1561, 2147483648
        %v1650 = vxor.u32 %v1566, 2147483648
        %v1651 = vxor.u32 %v1569, 2147483648
        %v1652 = vxor.u32 %v1574, 2147483648
        %v1653 = vxor.u32 %v1577, 2147483648
        %v1654 = vxor.u32 %v1582, 2147483648
        %v1655 = vxor.u32 %v1585, 2147483648
        %v1656 = vxor.u32 %v1590, 2147483648
        %v1657 = vxor.u32 %v1593, 2147483648
        %v1658 = vxor.u32 %v1598, 2147483648
        %v1659 = vxor.u32 %v1601, 2147483648
        %v1660 = vxor.u32 %v1606, 2147483648
        %v1661 = vxor.u32 %v1609, 2147483648
        %v1662 = vxor.u32 %v1614, 2147483648
        %v1663 = vxor.u32 %v1617, 2147483648
        %v1664 = vxor.u32 %v1622, 2147483648
        %v1665 = vxor.u32 %v1625, 2147483648
        %v1666 = vxor.u32 %v1630, 2147483648
        %v1667 = vxor.u32 %v1633, 2147483648
        %v1668 = vmul.f32 %v1636, 1.442695
        %v1669 = vpow.pop %v1668
        %v1670 = vmul.f32 %v1637, 1.442695
        %v1671 = vpow.pop %v1670
        %v1672 = vmul.f32 %v1638, 1.442695
        %v1673 = vpow.pop %v1672
        %v1674 = vmul.f32 %v1639, 1.442695
        %v1675 = vpow.pop %v1674
        %v1676 = vmul.f32 %v1640, 1.442695
        %v1677 = vpow.pop %v1676
        %v1678 = vmul.f32 %v1641, 1.442695
        %v1679 = vpow.pop %v1678
        %v1680 = vmul.f32 %v1642, 1.442695
        %v1681 = vpow.pop %v1680
        %v1682 = vmul.f32 %v1643, 1.442695
        %v1683 = vpow.pop %v1682
        %v1684 = vmul.f32 %v1644, 1.442695
        %v1685 = vpow.pop %v1684
        %v1686 = vmul.f32 %v1645, 1.442695
        %v1687 = vpow.pop %v1686
        %v1688 = vmul.f32 %v1646, 1.442695
        %v1689 = vpow.pop %v1688
        %v1690 = vmul.f32 %v1647, 1.442695
        %v1691 = vpow.pop %v1690
        %v1692 = vmul.f32 %v1648, 1.442695
        %v1693 = vpow.pop %v1692
        %v1694 = vmul.f32 %v1649, 1.442695
        %v1695 = vpow.pop %v1694
        %v1696 = vmul.f32 %v1650, 1.442695
        %v1697 = vpow.pop %v1696
        %v1698 = vmul.f32 %v1651, 1.442695
        %v1699 = vpow.pop %v1698
        %v1700 = vmul.f32 %v1652, 1.442695
        %v1701 = vpow.pop %v1700
        %v1702 = vmul.f32 %v1653, 1.442695
        %v1703 = vpow.pop %v1702
        %v1704 = vmul.f32 %v1654, 1.442695
        %v1705 = vpow.pop %v1704
        %v1706 = vmul.f32 %v1655, 1.442695
        %v1707 = vpow.pop %v1706
        %v1708 = vmul.f32 %v1656, 1.442695
        %v1709 = vpow.pop %v1708
        %v1710 = vmul.f32 %v1657, 1.442695
        %v1711 = vpow.pop %v1710
        %v1712 = vmul.f32 %v1658, 1.442695
        %v1713 = vpow.pop %v1712
        %v1714 = vmul.f32 %v1659, 1.442695
        %v1715 = vpow.pop %v1714
        %v1716 = vmul.f32 %v1660, 1.442695
        %v1717 = vpow.pop %v1716
        %v1718 = vmul.f32 %v1661, 1.442695
        %v1719 = vpow.pop %v1718
        %v1720 = vmul.f32 %v1662, 1.442695
        %v1721 = vpow.pop %v1720
        %v1722 = vmul.f32 %v1663, 1.442695
        %v1723 = vpow.pop %v1722
        %v1724 = vmul.f32 %v1664, 1.442695
        %v1725 = vpow.pop %v1724
        %v1726 = vmul.f32 %v1665, 1.442695
        %v1727 = vpow.pop %v1726
        %v1728 = vmul.f32 %v1666, 1.442695
        %v1729 = vpow.pop %v1728
        %v1730 = vmul.f32 %v1667, 1.442695
        %v1731 = vpow.pop %v1730
        %v1732 = vadd.f32 %v1669, 1.0
        %v1733 = vadd.f32 %v1671, 1.0
        %v1734 = vadd.f32 %v1673, 1.0
        %v1735 = vadd.f32 %v1675, 1.0
        %v1736 = vadd.f32 %v1677, 1.0
        %v1737 = vadd.f32 %v1679, 1.0
        %v1738 = vadd.f32 %v1681, 1.0
        %v1739 = vadd.f32 %v1683, 1.0
        %v1740 = vadd.f32 %v1685, 1.0
        %v1741 = vadd.f32 %v1687, 1.0
        %v1742 = vadd.f32 %v1689, 1.0
        %v1743 = vadd.f32 %v1691, 1.0
        %v1744 = vadd.f32 %v1693, 1.0
        %v1745 = vadd.f32 %v1695, 1.0
        %v1746 = vadd.f32 %v1697, 1.0
        %v1747 = vadd.f32 %v1699, 1.0
        %v1748 = vadd.f32 %v1701, 1.0
        %v1749 = vadd.f32 %v1703, 1.0
        %v1750 = vadd.f32 %v1705, 1.0
        %v1751 = vadd.f32 %v1707, 1.0
        %v1752 = vadd.f32 %v1709, 1.0
        %v1753 = vadd.f32 %v1711, 1.0
        %v1754 = vadd.f32 %v1713, 1.0
        %v1755 = vadd.f32 %v1715, 1.0
        %v1756 = vadd.f32 %v1717, 1.0
        %v1757 = vadd.f32 %v1719, 1.0
        %v1758 = vadd.f32 %v1721, 1.0
        %v1759 = vadd.f32 %v1723, 1.0
        %v1760 = vadd.f32 %v1725, 1.0
        %v1761 = vadd.f32 %v1727, 1.0
        %v1762 = vadd.f32 %v1729, 1.0
        %v1763 = vadd.f32 %v1731, 1.0
        %v1764 = vrcp.pop %v1732
        %v1765 = vmul.f32 1.0, %v1764
        %v1766 = vrcp.pop %v1733
        %v1767 = vmul.f32 1.0, %v1766
        %v1768 = vrcp.pop %v1734
        %v1769 = vmul.f32 1.0, %v1768
        %v1770 = vrcp.pop %v1735
        %v1771 = vmul.f32 1.0, %v1770
        %v1772 = vrcp.pop %v1736
        %v1773 = vmul.f32 1.0, %v1772
        %v1774 = vrcp.pop %v1737
        %v1775 = vmul.f32 1.0, %v1774
        %v1776 = vrcp.pop %v1738
        %v1777 = vmul.f32 1.0, %v1776
        %v1778 = vrcp.pop %v1739
        %v1779 = vmul.f32 1.0, %v1778
        %v1780 = vrcp.pop %v1740
        %v1781 = vmul.f32 1.0, %v1780
        %v1782 = vrcp.pop %v1741
        %v1783 = vmul.f32 1.0, %v1782
        %v1784 = vrcp.pop %v1742
        %v1785 = vmul.f32 1.0, %v1784
        %v1786 = vrcp.pop %v1743
        %v1787 = vmul.f32 1.0, %v1786
        %v1788 = vrcp.pop %v1744
        %v1789 = vmul.f32 1.0, %v1788
        %v1790 = vrcp.pop %v1745
        %v1791 = vmul.f32 1.0, %v1790
        %v1792 = vrcp.pop %v1746
        %v1793 = vmul.f32 1.0, %v1792
        %v1794 = vrcp.pop %v1747
        %v1795 = vmul.f32 1.0, %v1794
        %v1796 = vrcp.pop %v1748
        %v1797 = vmul.f32 1.0, %v1796
        %v1798 = vrcp.pop %v1749
        %v1799 = vmul.f32 1.0, %v1798
        %v1800 = vrcp.pop %v1750
        %v1801 = vmul.f32 1.0, %v1800
        %v1802 = vrcp.pop %v1751
        %v1803 = vmul.f32 1.0, %v1802
        %v1804 = vrcp.pop %v1752
        %v1805 = vmul.f32 1.0, %v1804
        %v1806 = vrcp.pop %v1753
        %v1807 = vmul.f32 1.0, %v1806
        %v1808 = vrcp.pop %v1754
        %v1809 = vmul.f32 1.0, %v1808
        %v1810 = vrcp.pop %v1755
        %v1811 = vmul.f32 1.0, %v1810
        %v1812 = vrcp.pop %v1756
        %v1813 = vmul.f32 1.0, %v1812
        %v1814 = vrcp.pop %v1757
        %v1815 = vmul.f32 1.0, %v1814
        %v1816 = vrcp.pop %v1758
        %v1817 = vmul.f32 1.0, %v1816
        %v1818 = vrcp.pop %v1759
        %v1819 = vmul.f32 1.0, %v1818
        %v1820 = vrcp.pop %v1760
        %v1821 = vmul.f32 1.0, %v1820
        %v1822 = vrcp.pop %v1761
        %v1823 = vmul.f32 1.0, %v1822
        %v1824 = vrcp.pop %v1762
        %v1825 = vmul.f32 1.0, %v1824
        %v1826 = vrcp.pop %v1763
        %v1827 = vmul.f32 1.0, %v1826
        %v1828 = vmul.f32 %v1510, %v1765
        %v1829 = vmul.f32 %v1513, %v1767
        %v1830 = vmul.f32 %v1518, %v1769
        %v1831 = vmul.f32 %v1521, %v1771
        %v1832 = vmul.f32 %v1526, %v1773
        %v1833 = vmul.f32 %v1529, %v1775
        %v1834 = vmul.f32 %v1534, %v1777
        %v1835 = vmul.f32 %v1537, %v1779
        %v1836 = vmul.f32 %v1542, %v1781
        %v1837 = vmul.f32 %v1545, %v1783
        %v1838 = vmul.f32 %v1550, %v1785
        %v1839 = vmul.f32 %v1553, %v1787
        %v1840 = vmul.f32 %v1558, %v1789
        %v1841 = vmul.f32 %v1561, %v1791
        %v1842 = vmul.f32 %v1566, %v1793
        %v1843 = vmul.f32 %v1569, %v1795
        %v1844 = vmul.f32 %v1574, %v1797
        %v1845 = vmul.f32 %v1577, %v1799
        %v1846 = vmul.f32 %v1582, %v1801
        %v1847 = vmul.f32 %v1585, %v1803
        %v1848 = vmul.f32 %v1590, %v1805
        %v1849 = vmul.f32 %v1593, %v1807
        %v1850 = vmul.f32 %v1598, %v1809
        %v1851 = vmul.f32 %v1601, %v1811
        %v1852 = vmul.f32 %v1606, %v1813
        %v1853 = vmul.f32 %v1609, %v1815
        %v1854 = vmul.f32 %v1614, %v1817
        %v1855 = vmul.f32 %v1617, %v1819
        %v1856 = vmul.f32 %v1622, %v1821
        %v1857 = vmul.f32 %v1625, %v1823
        %v1858 = vmul.f32 %v1630, %v1825
        %v1859 = vmul.f32 %v1633, %v1827
        %1860 = vst [vmem:[%s241] sm:$0xff] %v1828
        %1861 = vst [vmem:[%s241 + $0x8] sm:$0xff] %v1829
        %1862 = vst [vmem:[%s241 + $0x10] sm:$0xff] %v1830
        %1863 = vst [vmem:[%s241 + $0x18] sm:$0xff] %v1831
        %1864 = vst [vmem:[%s241 + $0x20] sm:$0xff] %v1832
        %1865 = vst [vmem:[%s241 + $0x28] sm:$0xff] %v1833
        %1866 = vst [vmem:[%s241 + $0x30] sm:$0xff] %v1834
        %1867 = vst [vmem:[%s241 + $0x38] sm:$0xff] %v1835
        %1868 = vst [vmem:[%s241 + $0x40] sm:$0xff] %v1836
        %1869 = vst [vmem:[%s241 + $0x48] sm:$0xff] %v1837
        %1870 = vst [vmem:[%s241 + $0x50] sm:$0xff] %v1838
        %1871 = vst [vmem:[%s241 + $0x58] sm:$0xff] %v1839
        %1872 = vst [vmem:[%s241 + $0x60] sm:$0xff] %v1840
        %1873 = vst [vmem:[%s241 + $0x68] sm:$0xff] %v1841
        %1874 = vst [vmem:[%s241 + $0x70] sm:$0xff] %v1842
        %1875 = vst [vmem:[%s241 + $0x78] sm:$0xff] %v1843
        %1876 = vst [vmem:[%s241 + $0x80] sm:$0xff] %v1844
        %1877 = vst [vmem:[%s241 + $0x88] sm:$0xff] %v1845
        %1878 = vst [vmem:[%s241 + $0x90] sm:$0xff] %v1846
        %1879 = vst [vmem:[%s241 + $0x98] sm:$0xff] %v1847
        %1880 = vst [vmem:[%s241 + $0xa0] sm:$0xff] %v1848
        %1881 = vst [vmem:[%s241 + $0xa8] sm:$0xff] %v1849
        %1882 = vst [vmem:[%s241 + $0xb0] sm:$0xff] %v1850
        %1883 = vst [vmem:[%s241 + $0xb8] sm:$0xff] %v1851
        %1884 = vst [vmem:[%s241 + $0xc0] sm:$0xff] %v1852
        %1885 = vst [vmem:[%s241 + $0xc8] sm:$0xff] %v1853
        %1886 = vst [vmem:[%s241 + $0xd0] sm:$0xff] %v1854
        %1887 = vst [vmem:[%s241 + $0xd8] sm:$0xff] %v1855
        %1888 = vst [vmem:[%s241 + $0xe0] sm:$0xff] %v1856
        %1889 = vst [vmem:[%s241 + $0xe8] sm:$0xff] %v1857
        %1890 = vst [vmem:[%s241 + $0xf0] sm:$0xff] %v1858
        %1891 = vst [vmem:[%s241 + $0xf8] sm:$0xff] %v1859
        %s1892 = sand.u32 %s153, 1
        %s1893 = scalar_lea.sflag [#allocation3], %s1892
        %s1894 = sand.u32 %s153, 1
        %s1895 = smul.addr %s1894, 256
        %s1896 = scalar_lea.vmem [#allocation2], %s1895
        // Predicated region
        $region41: #{tpu_custom_call.1} parent=39 // pred_check
          %p1897 = pneg %p163
        $region42: #{tpu_custom_call.1} parent=39 // pred_check_branch
          %1899 = sbr.rel (%p1897) target = $region44
        $region43: #{tpu_custom_call.1} parent=39 // pred_region
          %s1900 = smul.u32 16, %s24
          %s1902 = ssub.s32 4096, 4096
          %1903 = vsyncadd %s1893, %s1902
          %s1904 = smul.addr %s1900, 2
          %s1905 = smul.addr %s23, 32
          %s1906 = sadd.s32 %s1904, %s1905
          %s1907 = smul.addr %s1906, 128
          %s1908 = scalar_lea.hbm %s5, %s1907
          %s1909 = sshll.u32 %s1896, 4
          %s1910 = int_to_ptr.vmem [resolvable:$true] %s1909
          %1915 = dma.vmem_to_hbm [thread:$0]  %s1910, 4096, %s1908, %s1893, 128, 128, 8
        $region44: #{tpu_custom_call.1} parent=39 // pred_fallthru
          _
      $region40: #{tpu_custom_call.1} parent=5 // pred_fallthru
        _
      %p1916 = scmp.le.s32.totalorder 2, %s14
      // Predicated region
      $region45: #{tpu_custom_call.1} parent=5 // pred_check
        %p1917 = pneg %p1916
      $region46: #{tpu_custom_call.1} parent=5 // pred_check_branch
        %1919 = sbr.rel (%p1917) target = $region48
      $region47: #{tpu_custom_call.1} parent=5 // pred_region
        %s1920 = ssub.s32 %s14, 2
        // Predicated region
        $region49: #{tpu_custom_call.1} parent=47 // pred_check
          %p1921 = pneg %p169
        $region50: #{tpu_custom_call.1} parent=47 // pred_check_branch
          %1923 = sbr.rel (%p1921) target = $region52
        $region51: #{tpu_custom_call.1} parent=47 // pred_region
          %s1924 = sand.u32 %s154, 1
          %s1925 = scalar_lea.sflag [#allocation3], %s1924
          %s1926 = sand.u32 %s154, 1
          %s1927 = smul.addr %s1926, 256
          %s1928 = scalar_lea.vmem [#allocation2], %s1927
          %1929 = dma.done %s1925, 4096
        $region52: #{tpu_custom_call.1} parent=47 // pred_fallthru
          _
      $region48: #{tpu_custom_call.1} parent=5 // pred_fallthru
        _
    $region6: #{tpu_custom_call.1} parent=1 // loop_footer
      %s18 = sadd.s32 1, %s14
    $region7: #{tpu_custom_call.1} parent=1 // loop_footer_branch
      %13 = sbr.rel target = $region3
    $region8: #{tpu_custom_call.1} parent=1 // loop_exit
      _
    %1930 = vsyncpa [#allocation3], 1
    %s1931 = scalar_lea.sflag [#allocation3], 1
    %1932 = vsyncpa %s1931, 1

</llo_original>
